<compile_context>
chip_gen: v5e
topology: v5e:2x2
jax: 0.10.0
libtpu: 0.0.40
codegen_flags: <defaults>
</compile_context>

<pallas_src>
import jax
import jax.numpy as jnp
from jax.experimental import pallas as pl
from jax.experimental.pallas import tpu as pltpu


def _round_up(x, m):
    return ((x + m - 1) // m) * m


# ----------------------------------------------------------------------------
# Kernel
# ----------------------------------------------------------------------------
def _lstm_classifier_kernel(
    sent_ref,     # SMEM (S, T)     int32 token ids (scalar prefetch)
    xp_f_ref,     # VMEM (V, 4*Hp)  f32  precomputed emb@W_ih_f + b_f (padded gates)
    xp_b_ref,     # VMEM (V, 4*Hp)  f32  precomputed emb@W_ih_b + b_b (padded gates)
    whh_ref,      # VMEM (H, 4*Hp)  bf16 forward hidden->gate weights (K unpadded)
    wlab_f_ref,   # VMEM (H, L)     f32  hidden2label, forward half
    wlab_b_ref,   # VMEM (H, L)     f32  hidden2label, backward half
    blab_ref,     # VMEM (1, L)     f32  hidden2label bias
    out_ref,      # VMEM (1, 1, L)  f32  log-probabilities for this sentence
):
    s = pl.program_id(0)
    T = sent_ref.shape[1]
    H = whh_ref.shape[0]
    Hp = xp_f_ref.shape[1] // 4

    whh = whh_ref[...]                                     # resident across the unroll

    def cell(gates, c_prev):
        # Gate slices are vreg-aligned: Hp is a multiple of 128 lanes.
        i = jax.nn.sigmoid(gates[:, 0 * Hp:1 * Hp])
        f = jax.nn.sigmoid(gates[:, 1 * Hp:2 * Hp])
        g = jnp.tanh(gates[:, 2 * Hp:3 * Hp])
        o = jax.nn.sigmoid(gates[:, 3 * Hp:4 * Hp])
        c = f * c_prev + i * g
        h = o * jnp.tanh(c)
        return h, c

    zeros = jnp.zeros((1, Hp), jnp.float32)

    # ---- Forward recurrence, fully unrolled (T is static at trace time).
    # Step 0 has h == 0, so its hidden matmul is skipped entirely; every
    # xp row gather is a full, lane-aligned (1, 4*Hp) load.
    h, c = cell(xp_f_ref[pl.ds(sent_ref[s, 0], 1), :], zeros)
    for t in range(1, T):
        xt = xp_f_ref[pl.ds(sent_ref[s, t], 1), :]
        gates = xt + jnp.dot(h[:, :H].astype(jnp.bfloat16), whh,
                             preferred_element_type=jnp.float32)
        h, c = cell(gates, c)

    # ---- Backward direction at t = T-1: the FIRST step of the reverse scan
    # from the zero state, so h0 @ W_hh_b == 0 and W_hh_b is not needed.
    # Valid ONLY because the classifier consumes lstm_out[-1].
    h_b, _ = cell(xp_b_ref[pl.ds(sent_ref[s, T - 1], 1), :], zeros)

    # ---- hidden2label (split halves, no concat) + log_softmax. ----
    y = (jnp.dot(h[:, :H], wlab_f_ref[...], preferred_element_type=jnp.float32)
         + jnp.dot(h_b[:, :H], wlab_b_ref[...], preferred_element_type=jnp.float32)
         + blab_ref[...])                                   # (1, L)
    m = jnp.max(y, axis=1, keepdims=True)
    z = y - m
    out_ref[0] = z - jnp.log(jnp.sum(jnp.exp(z), axis=1, keepdims=True))


# ----------------------------------------------------------------------------
# Parameter construction / kernel-layout preparation
# ----------------------------------------------------------------------------
def init_params(key, vocab_size, embedding_dim, hidden_dim, label_size):
    E, H, L = embedding_dim, hidden_dim, label_size
    ks = jax.random.split(key, 9)
    s = 0.1
    return {
        "emb":   jax.random.normal(ks[0], (vocab_size, E), jnp.float32) * s,
        "wih_f": jax.random.normal(ks[1], (E, 4 * H), jnp.float32) * s,
        "whh_f": jax.random.normal(ks[2], (H, 4 * H), jnp.float32) * s,
        "b_f":   jax.random.normal(ks[3], (1, 4 * H), jnp.float32) * s,
        "wih_b": jax.random.normal(ks[4], (E, 4 * H), jnp.float32) * s,
        "whh_b": jax.random.normal(ks[5], (H, 4 * H), jnp.float32) * s,
        "b_b":   jax.random.normal(ks[6], (1, 4 * H), jnp.float32) * s,
        "wlab":  jax.random.normal(ks[7], (2 * H, L), jnp.float32) * s,
        "blab":  jax.random.normal(ks[8], (1, L), jnp.float32) * s,
    }


def _pad_gate_cols(w, H, Hp):
    """(..., 4H) -> (..., 4Hp): zero-pad each PyTorch gate block [i,f,g,o]."""
    pad = [(0, 0)] * (w.ndim - 1) + [(0, Hp - H)]
    parts = [jnp.pad(w[..., g * H:(g + 1) * H], pad) for g in range(4)]
    return jnp.concatenate(parts, axis=-1)


def prepare_kernel_params(params, hidden_dim):
    """Fold embedding + input projection + biases into per-token gate tables,
    pad only the gate (output) axis to Hp (multiple of 128), keep the
    recurrence contraction dim unpadded, and cast W_hh_f to bf16."""
    H = hidden_dim
    Hp = _round_up(max(H, 1), 128)
    xp_f = params["emb"] @ params["wih_f"] + params["b_f"]          # (V, 4H) f32
    xp_b = params["emb"] @ params["wih_b"] + params["b_b"]          # (V, 4H) f32
    return {
        "xp_f":   _pad_gate_cols(xp_f, H, Hp),                      # (V, 4Hp)
        "xp_b":   _pad_gate_cols(xp_b, H, Hp),                      # (V, 4Hp)
        "whh_f":  _pad_gate_cols(params["whh_f"], H, Hp).astype(jnp.bfloat16),
        "wlab_f": params["wlab"][:H],                               # (H, L)
        "wlab_b": params["wlab"][H:],                               # (H, L)
        "blab":   params["blab"],                                   # (1, L)
    }


# ----------------------------------------------------------------------------
# Wrapper: grid over sentences, weights resident in VMEM, ids scalar-prefetched
# ----------------------------------------------------------------------------
def lstm_classifier_forward(sentences, kparams, label_size):
    sentences = jnp.atleast_2d(sentences).astype(jnp.int32)          # (S, T)
    S, _ = sentences.shape
    L = label_size

    def const_spec(shape):
        return pl.BlockSpec(shape, lambda s, sent, _shape=shape: (0,) * len(_shape))

    grid_spec = pltpu.PrefetchScalarGridSpec(
        num_scalar_prefetch=1,
        grid=(S,),
        in_specs=[
            const_spec(kparams["xp_f"].shape),
            const_spec(kparams["xp_b"].shape),
            const_spec(kparams["whh_f"].shape),
            const_spec(kparams["wlab_f"].shape),
            const_spec(kparams["wlab_b"].shape),
            const_spec(kparams["blab"].shape),
        ],
        out_specs=pl.BlockSpec((1, 1, L), lambda s, sent: (s, 0, 0)),
    )
    out = pl.pallas_call(
        _lstm_classifier_kernel,
        out_shape=jax.ShapeDtypeStruct((S, 1, L), jnp.float32),
        grid_spec=grid_spec,
        compiler_params=pltpu.CompilerParams(
            dimension_semantics=("parallel",)),
    )(sentences, kparams["xp_f"], kparams["xp_b"], kparams["whh_f"],
      kparams["wlab_f"], kparams["wlab_b"], kparams["blab"])
    return out[:, 0, :]                                              # (S, L)


# ----------------------------------------------------------------------------
# Pure-JAX reference mirroring PyTorch LSTMClassifier.forward (unpadded, f32).
# ----------------------------------------------------------------------------
def reference_forward(sentence, params, hidden_dim, batch_size=1):
    H = hidden_dim
    T = sentence.shape[0]
    emb = jnp.take(params["emb"], sentence, axis=0)
    x = emb.reshape(T, batch_size, -1)

    def cell(x_t, h, c, wih, whh, b):
        gates = x_t @ wih + h @ whh + b
        i = jax.nn.sigmoid(gates[:, :H])
        f = jax.nn.sigmoid(gates[:, H:2 * H])
        g = jnp.tanh(gates[:, 2 * H:3 * H])
        o = jax.nn.sigmoid(gates[:, 3 * H:])
        c = f * c + i * g
        h = o * jnp.tanh(c)
        return h, c

    h = jnp.zeros((batch_size, H)); c = jnp.zeros((batch_size, H))
    for t in range(T):
        h, c = cell(x[t], h, c, params["wih_f"], params["whh_f"], params["b_f"])
    hb = jnp.zeros((batch_size, H)); cb = jnp.zeros((batch_size, H))
    hb_out = None
    for t in range(T - 1, -1, -1):
        hb, cb = cell(x[t], hb, cb, params["wih_b"], params["whh_b"], params["b_b"])
        if t == T - 1:
            hb_out = hb
    h_last = jnp.concatenate([h, hb_out], axis=1)
    y = h_last @ params["wlab"] + params["blab"]
    return jax.nn.log_softmax(y, axis=1)


if __name__ == "__main__":
    vocab_size, embedding_dim, hidden_dim, label_size = 50, 32, 32, 5
    batch_size = 1
    seq_len, num_sentences = 8, 4

    key = jax.random.PRNGKey(0)
    pkey, skey = jax.random.split(key)
    params = init_params(pkey, vocab_size, embedding_dim, hidden_dim, label_size)
    sentences = jax.random.randint(skey, (num_sentences, seq_len), 0, vocab_size,
                                   dtype=jnp.int32)

    kparams = prepare_kernel_params(params, hidden_dim)

    out = lstm_classifier_forward(sentences, kparams, label_size)
    out = jax.block_until_ready(out)

    ref = jnp.stack([reference_forward(sentences[i], params, hidden_dim,
                                       batch_size)[0]
                     for i in range(num_sentences)])

    assert out.shape == (num_sentences, label_size)
    # W_hh_f (and the h operand of the recurrence matmul) are bf16 in-kernel;
    # everything else is f32, so the error stays ~1e-3 — relaxed tolerance.
    assert bool(jnp.allclose(out, ref, atol=1e-2, rtol=1e-2)), (out, ref)

    print("KERNEL_OK")
</pallas_src>

<mosaic_0001>
module attributes {stable_mosaic.version = 11 : i64} {
  func.func @_lstm_classifier_kernel(%arg0: i32, %arg1: memref<4x8xi32, #tpu.memory_space<smem>>, %arg2: memref<50x512xf32, #tpu.memory_space<vmem>>, %arg3: memref<50x512xf32, #tpu.memory_space<vmem>>, %arg4: memref<32x512xbf16, #tpu.memory_space<vmem>>, %arg5: memref<32x5xf32, #tpu.memory_space<vmem>>, %arg6: memref<32x5xf32, #tpu.memory_space<vmem>>, %arg7: memref<1x5xf32, #tpu.memory_space<vmem>>, %arg8: memref<1x1x5xf32, #tpu.memory_space<vmem>>) attributes {dimension_semantics = [#tpu.dimension_semantics<parallel>], iteration_bounds = array<i64: 4>, scalar_prefetch = 1 : i64, scratch_operands = 0 : i64, tpu.core_type = #tpu.core_type<tc>, window_params = [{pipeline_mode = #tpu.pipeline_mode<synchronous>, transform_indices = @transform_0, window_bounds = array<i64: 50, 512>}, {pipeline_mode = #tpu.pipeline_mode<synchronous>, transform_indices = @transform_1, window_bounds = array<i64: 50, 512>}, {pipeline_mode = #tpu.pipeline_mode<synchronous>, transform_indices = @transform_2, window_bounds = array<i64: 32, 512>}, {pipeline_mode = #tpu.pipeline_mode<synchronous>, transform_indices = @transform_3, window_bounds = array<i64: 32, 5>}, {pipeline_mode = #tpu.pipeline_mode<synchronous>, transform_indices = @transform_4, window_bounds = array<i64: 32, 5>}, {pipeline_mode = #tpu.pipeline_mode<synchronous>, transform_indices = @transform_5, window_bounds = array<i64: 1, 5>}, {transform_indices = @transform_6, window_bounds = array<i64: 1, 1, 5>}]} {
    %c0 = arith.constant 0 : index
    %c0_0 = arith.constant 0 : index
    %0 = vector.load %arg4[%c0, %c0_0] : memref<32x512xbf16, #tpu.memory_space<vmem>>, vector<32x512xbf16>
    %cst = arith.constant 0.000000e+00 : f32
    %1 = vector.broadcast %cst : f32 to vector<1x128xf32>
    %2 = arith.index_cast %arg0 : i32 to index
    %c0_1 = arith.constant 0 : index
    %3 = memref.load %arg1[%2, %c0_1] : memref<4x8xi32, #tpu.memory_space<smem>>
    %4 = arith.index_cast %3 : i32 to index
    %c0_2 = arith.constant 0 : index
    %5 = vector.load %arg2[%4, %c0_2] : memref<50x512xf32, #tpu.memory_space<vmem>>, vector<1x512xf32>
    %6 = vector.extract_strided_slice %5 {offsets = [0, 0], sizes = [1, 128], strides = [1, 1]} : vector<1x512xf32> to vector<1x128xf32>
    %7 = arith.negf %6 : vector<1x128xf32>
    %8 = math.exp %7 : vector<1x128xf32>
    %cst_3 = arith.constant 1.000000e+00 : f32
    %9 = vector.broadcast %cst_3 : f32 to vector<1x128xf32>
    %10 = arith.addf %9, %8 : vector<1x128xf32>
    %11 = arith.divf %9, %10 : vector<1x128xf32>
    %12 = vector.extract_strided_slice %5 {offsets = [0, 128], sizes = [1, 128], strides = [1, 1]} : vector<1x512xf32> to vector<1x128xf32>
    %13 = arith.negf %12 : vector<1x128xf32>
    %14 = math.exp %13 : vector<1x128xf32>
    %cst_4 = arith.constant 1.000000e+00 : f32
    %15 = vector.broadcast %cst_4 : f32 to vector<1x128xf32>
    %16 = arith.addf %15, %14 : vector<1x128xf32>
    %17 = arith.divf %15, %16 : vector<1x128xf32>
    %18 = vector.extract_strided_slice %5 {offsets = [0, 256], sizes = [1, 128], strides = [1, 1]} : vector<1x512xf32> to vector<1x128xf32>
    %19 = math.tanh %18 : vector<1x128xf32>
    %20 = vector.extract_strided_slice %5 {offsets = [0, 384], sizes = [1, 128], strides = [1, 1]} : vector<1x512xf32> to vector<1x128xf32>
    %21 = arith.negf %20 : vector<1x128xf32>
    %22 = math.exp %21 : vector<1x128xf32>
    %cst_5 = arith.constant 1.000000e+00 : f32
    %23 = vector.broadcast %cst_5 : f32 to vector<1x128xf32>
    %24 = arith.addf %23, %22 : vector<1x128xf32>
    %25 = arith.divf %23, %24 : vector<1x128xf32>
    %26 = arith.mulf %17, %1 : vector<1x128xf32>
    %27 = arith.mulf %11, %19 : vector<1x128xf32>
    %28 = arith.addf %26, %27 : vector<1x128xf32>
    %29 = math.tanh %28 : vector<1x128xf32>
    %30 = arith.mulf %25, %29 : vector<1x128xf32>
    %31 = arith.index_cast %arg0 : i32 to index
    %c1 = arith.constant 1 : index
    %32 = memref.load %arg1[%31, %c1] : memref<4x8xi32, #tpu.memory_space<smem>>
    %33 = arith.index_cast %32 : i32 to index
    %c0_6 = arith.constant 0 : index
    %34 = vector.load %arg2[%33, %c0_6] : memref<50x512xf32, #tpu.memory_space<vmem>>, vector<1x512xf32>
    %35 = vector.extract_strided_slice %30 {offsets = [0, 0], sizes = [1, 32], strides = [1, 1]} : vector<1x128xf32> to vector<1x32xf32>
    %36 = arith.truncf %35 : vector<1x32xf32> to vector<1x32xbf16>
    %cst_7 = arith.constant dense<0.000000e+00> : vector<1x512xf32>
    %37 = tpu.matmul %36, %0, %cst_7 {dimension_numbers = #tpu.dot_dimension_numbers<[1], [0], [0], [1], [0, 0, 1, 1], [], []>} : vector<1x32xbf16>, vector<32x512xbf16>, vector<1x512xf32> -> vector<1x512xf32>
    %38 = arith.addf %34, %37 : vector<1x512xf32>
    %39 = vector.extract_strided_slice %38 {offsets = [0, 0], sizes = [1, 128], strides = [1, 1]} : vector<1x512xf32> to vector<1x128xf32>
    %40 = arith.negf %39 : vector<1x128xf32>
    %41 = math.exp %40 : vector<1x128xf32>
    %cst_8 = arith.constant 1.000000e+00 : f32
    %42 = vector.broadcast %cst_8 : f32 to vector<1x128xf32>
    %43 = arith.addf %42, %41 : vector<1x128xf32>
    %44 = arith.divf %42, %43 : vector<1x128xf32>
    %45 = vector.extract_strided_slice %38 {offsets = [0, 128], sizes = [1, 128], strides = [1, 1]} : vector<1x512xf32> to vector<1x128xf32>
    %46 = arith.negf %45 : vector<1x128xf32>
    %47 = math.exp %46 : vector<1x128xf32>
    %cst_9 = arith.constant 1.000000e+00 : f32
    %48 = vector.broadcast %cst_9 : f32 to vector<1x128xf32>
    %49 = arith.addf %48, %47 : vector<1x128xf32>
    %50 = arith.divf %48, %49 : vector<1x128xf32>
    %51 = vector.extract_strided_slice %38 {offsets = [0, 256], sizes = [1, 128], strides = [1, 1]} : vector<1x512xf32> to vector<1x128xf32>
    %52 = math.tanh %51 : vector<1x128xf32>
    %53 = vector.extract_strided_slice %38 {offsets = [0, 384], sizes = [1, 128], strides = [1, 1]} : vector<1x512xf32> to vector<1x128xf32>
    %54 = arith.negf %53 : vector<1x128xf32>
    %55 = math.exp %54 : vector<1x128xf32>
    %cst_10 = arith.constant 1.000000e+00 : f32
    %56 = vector.broadcast %cst_10 : f32 to vector<1x128xf32>
    %57 = arith.addf %56, %55 : vector<1x128xf32>
    %58 = arith.divf %56, %57 : vector<1x128xf32>
    %59 = arith.mulf %50, %28 : vector<1x128xf32>
    %60 = arith.mulf %44, %52 : vector<1x128xf32>
    %61 = arith.addf %59, %60 : vector<1x128xf32>
    %62 = math.tanh %61 : vector<1x128xf32>
    %63 = arith.mulf %58, %62 : vector<1x128xf32>
    %64 = arith.index_cast %arg0 : i32 to index
    %c2 = arith.constant 2 : index
    %65 = memref.load %arg1[%64, %c2] : memref<4x8xi32, #tpu.memory_space<smem>>
    %66 = arith.index_cast %65 : i32 to index
    %c0_11 = arith.constant 0 : index
    %67 = vector.load %arg2[%66, %c0_11] : memref<50x512xf32, #tpu.memory_space<vmem>>, vector<1x512xf32>
    %68 = vector.extract_strided_slice %63 {offsets = [0, 0], sizes = [1, 32], strides = [1, 1]} : vector<1x128xf32> to vector<1x32xf32>
    %69 = arith.truncf %68 : vector<1x32xf32> to vector<1x32xbf16>
    %cst_12 = arith.constant dense<0.000000e+00> : vector<1x512xf32>
    %70 = tpu.matmul %69, %0, %cst_12 {dimension_numbers = #tpu.dot_dimension_numbers<[1], [0], [0], [1], [0, 0, 1, 1], [], []>} : vector<1x32xbf16>, vector<32x512xbf16>, vector<1x512xf32> -> vector<1x512xf32>
    %71 = arith.addf %67, %70 : vector<1x512xf32>
    %72 = vector.extract_strided_slice %71 {offsets = [0, 0], sizes = [1, 128], strides = [1, 1]} : vector<1x512xf32> to vector<1x128xf32>
    %73 = arith.negf %72 : vector<1x128xf32>
    %74 = math.exp %73 : vector<1x128xf32>
    %cst_13 = arith.constant 1.000000e+00 : f32
    %75 = vector.broadcast %cst_13 : f32 to vector<1x128xf32>
    %76 = arith.addf %75, %74 : vector<1x128xf32>
    %77 = arith.divf %75, %76 : vector<1x128xf32>
    %78 = vector.extract_strided_slice %71 {offsets = [0, 128], sizes = [1, 128], strides = [1, 1]} : vector<1x512xf32> to vector<1x128xf32>
    %79 = arith.negf %78 : vector<1x128xf32>
    %80 = math.exp %79 : vector<1x128xf32>
    %cst_14 = arith.constant 1.000000e+00 : f32
    %81 = vector.broadcast %cst_14 : f32 to vector<1x128xf32>
    %82 = arith.addf %81, %80 : vector<1x128xf32>
    %83 = arith.divf %81, %82 : vector<1x128xf32>
    %84 = vector.extract_strided_slice %71 {offsets = [0, 256], sizes = [1, 128], strides = [1, 1]} : vector<1x512xf32> to vector<1x128xf32>
    %85 = math.tanh %84 : vector<1x128xf32>
    %86 = vector.extract_strided_slice %71 {offsets = [0, 384], sizes = [1, 128], strides = [1, 1]} : vector<1x512xf32> to vector<1x128xf32>
    %87 = arith.negf %86 : vector<1x128xf32>
    %88 = math.exp %87 : vector<1x128xf32>
    %cst_15 = arith.constant 1.000000e+00 : f32
    %89 = vector.broadcast %cst_15 : f32 to vector<1x128xf32>
    %90 = arith.addf %89, %88 : vector<1x128xf32>
    %91 = arith.divf %89, %90 : vector<1x128xf32>
    %92 = arith.mulf %83, %61 : vector<1x128xf32>
    %93 = arith.mulf %77, %85 : vector<1x128xf32>
    %94 = arith.addf %92, %93 : vector<1x128xf32>
    %95 = math.tanh %94 : vector<1x128xf32>
    %96 = arith.mulf %91, %95 : vector<1x128xf32>
    %97 = arith.index_cast %arg0 : i32 to index
    %c3 = arith.constant 3 : index
    %98 = memref.load %arg1[%97, %c3] : memref<4x8xi32, #tpu.memory_space<smem>>
    %99 = arith.index_cast %98 : i32 to index
    %c0_16 = arith.constant 0 : index
    %100 = vector.load %arg2[%99, %c0_16] : memref<50x512xf32, #tpu.memory_space<vmem>>, vector<1x512xf32>
    %101 = vector.extract_strided_slice %96 {offsets = [0, 0], sizes = [1, 32], strides = [1, 1]} : vector<1x128xf32> to vector<1x32xf32>
    %102 = arith.truncf %101 : vector<1x32xf32> to vector<1x32xbf16>
    %cst_17 = arith.constant dense<0.000000e+00> : vector<1x512xf32>
    %103 = tpu.matmul %102, %0, %cst_17 {dimension_numbers = #tpu.dot_dimension_numbers<[1], [0], [0], [1], [0, 0, 1, 1], [], []>} : vector<1x32xbf16>, vector<32x512xbf16>, vector<1x512xf32> -> vector<1x512xf32>
    %104 = arith.addf %100, %103 : vector<1x512xf32>
    %105 = vector.extract_strided_slice %104 {offsets = [0, 0], sizes = [1, 128], strides = [1, 1]} : vector<1x512xf32> to vector<1x128xf32>
    %106 = arith.negf %105 : vector<1x128xf32>
    %107 = math.exp %106 : vector<1x128xf32>
    %cst_18 = arith.constant 1.000000e+00 : f32
    %108 = vector.broadcast %cst_18 : f32 to vector<1x128xf32>
    %109 = arith.addf %108, %107 : vector<1x128xf32>
    %110 = arith.divf %108, %109 : vector<1x128xf32>
    %111 = vector.extract_strided_slice %104 {offsets = [0, 128], sizes = [1, 128], strides = [1, 1]} : vector<1x512xf32> to vector<1x128xf32>
    %112 = arith.negf %111 : vector<1x128xf32>
    %113 = math.exp %112 : vector<1x128xf32>
    %cst_19 = arith.constant 1.000000e+00 : f32
    %114 = vector.broadcast %cst_19 : f32 to vector<1x128xf32>
    %115 = arith.addf %114, %113 : vector<1x128xf32>
    %116 = arith.divf %114, %115 : vector<1x128xf32>
    %117 = vector.extract_strided_slice %104 {offsets = [0, 256], sizes = [1, 128], strides = [1, 1]} : vector<1x512xf32> to vector<1x128xf32>
    %118 = math.tanh %117 : vector<1x128xf32>
    %119 = vector.extract_strided_slice %104 {offsets = [0, 384], sizes = [1, 128], strides = [1, 1]} : vector<1x512xf32> to vector<1x128xf32>
    %120 = arith.negf %119 : vector<1x128xf32>
    %121 = math.exp %120 : vector<1x128xf32>
    %cst_20 = arith.constant 1.000000e+00 : f32
    %122 = vector.broadcast %cst_20 : f32 to vector<1x128xf32>
    %123 = arith.addf %122, %121 : vector<1x128xf32>
    %124 = arith.divf %122, %123 : vector<1x128xf32>
    %125 = arith.mulf %116, %94 : vector<1x128xf32>
    %126 = arith.mulf %110, %118 : vector<1x128xf32>
    %127 = arith.addf %125, %126 : vector<1x128xf32>
    %128 = math.tanh %127 : vector<1x128xf32>
    %129 = arith.mulf %124, %128 : vector<1x128xf32>
    %130 = arith.index_cast %arg0 : i32 to index
    %c4 = arith.constant 4 : index
    %131 = memref.load %arg1[%130, %c4] : memref<4x8xi32, #tpu.memory_space<smem>>
    %132 = arith.index_cast %131 : i32 to index
    %c0_21 = arith.constant 0 : index
    %133 = vector.load %arg2[%132, %c0_21] : memref<50x512xf32, #tpu.memory_space<vmem>>, vector<1x512xf32>
    %134 = vector.extract_strided_slice %129 {offsets = [0, 0], sizes = [1, 32], strides = [1, 1]} : vector<1x128xf32> to vector<1x32xf32>
    %135 = arith.truncf %134 : vector<1x32xf32> to vector<1x32xbf16>
    %cst_22 = arith.constant dense<0.000000e+00> : vector<1x512xf32>
    %136 = tpu.matmul %135, %0, %cst_22 {dimension_numbers = #tpu.dot_dimension_numbers<[1], [0], [0], [1], [0, 0, 1, 1], [], []>} : vector<1x32xbf16>, vector<32x512xbf16>, vector<1x512xf32> -> vector<1x512xf32>
    %137 = arith.addf %133, %136 : vector<1x512xf32>
    %138 = vector.extract_strided_slice %137 {offsets = [0, 0], sizes = [1, 128], strides = [1, 1]} : vector<1x512xf32> to vector<1x128xf32>
    %139 = arith.negf %138 : vector<1x128xf32>
    %140 = math.exp %139 : vector<1x128xf32>
    %cst_23 = arith.constant 1.000000e+00 : f32
    %141 = vector.broadcast %cst_23 : f32 to vector<1x128xf32>
    %142 = arith.addf %141, %140 : vector<1x128xf32>
    %143 = arith.divf %141, %142 : vector<1x128xf32>
    %144 = vector.extract_strided_slice %137 {offsets = [0, 128], sizes = [1, 128], strides = [1, 1]} : vector<1x512xf32> to vector<1x128xf32>
    %145 = arith.negf %144 : vector<1x128xf32>
    %146 = math.exp %145 : vector<1x128xf32>
    %cst_24 = arith.constant 1.000000e+00 : f32
    %147 = vector.broadcast %cst_24 : f32 to vector<1x128xf32>
    %148 = arith.addf %147, %146 : vector<1x128xf32>
    %149 = arith.divf %147, %148 : vector<1x128xf32>
    %150 = vector.extract_strided_slice %137 {offsets = [0, 256], sizes = [1, 128], strides = [1, 1]} : vector<1x512xf32> to vector<1x128xf32>
    %151 = math.tanh %150 : vector<1x128xf32>
    %152 = vector.extract_strided_slice %137 {offsets = [0, 384], sizes = [1, 128], strides = [1, 1]} : vector<1x512xf32> to vector<1x128xf32>
    %153 = arith.negf %152 : vector<1x128xf32>
    %154 = math.exp %153 : vector<1x128xf32>
    %cst_25 = arith.constant 1.000000e+00 : f32
    %155 = vector.broadcast %cst_25 : f32 to vector<1x128xf32>
    %156 = arith.addf %155, %154 : vector<1x128xf32>
    %157 = arith.divf %155, %156 : vector<1x128xf32>
    %158 = arith.mulf %149, %127 : vector<1x128xf32>
    %159 = arith.mulf %143, %151 : vector<1x128xf32>
    %160 = arith.addf %158, %159 : vector<1x128xf32>
    %161 = math.tanh %160 : vector<1x128xf32>
    %162 = arith.mulf %157, %161 : vector<1x128xf32>
    %163 = arith.index_cast %arg0 : i32 to index
    %c5 = arith.constant 5 : index
    %164 = memref.load %arg1[%163, %c5] : memref<4x8xi32, #tpu.memory_space<smem>>
    %165 = arith.index_cast %164 : i32 to index
    %c0_26 = arith.constant 0 : index
    %166 = vector.load %arg2[%165, %c0_26] : memref<50x512xf32, #tpu.memory_space<vmem>>, vector<1x512xf32>
    %167 = vector.extract_strided_slice %162 {offsets = [0, 0], sizes = [1, 32], strides = [1, 1]} : vector<1x128xf32> to vector<1x32xf32>
    %168 = arith.truncf %167 : vector<1x32xf32> to vector<1x32xbf16>
    %cst_27 = arith.constant dense<0.000000e+00> : vector<1x512xf32>
    %169 = tpu.matmul %168, %0, %cst_27 {dimension_numbers = #tpu.dot_dimension_numbers<[1], [0], [0], [1], [0, 0, 1, 1], [], []>} : vector<1x32xbf16>, vector<32x512xbf16>, vector<1x512xf32> -> vector<1x512xf32>
    %170 = arith.addf %166, %169 : vector<1x512xf32>
    %171 = vector.extract_strided_slice %170 {offsets = [0, 0], sizes = [1, 128], strides = [1, 1]} : vector<1x512xf32> to vector<1x128xf32>
    %172 = arith.negf %171 : vector<1x128xf32>
    %173 = math.exp %172 : vector<1x128xf32>
    %cst_28 = arith.constant 1.000000e+00 : f32
    %174 = vector.broadcast %cst_28 : f32 to vector<1x128xf32>
    %175 = arith.addf %174, %173 : vector<1x128xf32>
    %176 = arith.divf %174, %175 : vector<1x128xf32>
    %177 = vector.extract_strided_slice %170 {offsets = [0, 128], sizes = [1, 128], strides = [1, 1]} : vector<1x512xf32> to vector<1x128xf32>
    %178 = arith.negf %177 : vector<1x128xf32>
    %179 = math.exp %178 : vector<1x128xf32>
    %cst_29 = arith.constant 1.000000e+00 : f32
    %180 = vector.broadcast %cst_29 : f32 to vector<1x128xf32>
    %181 = arith.addf %180, %179 : vector<1x128xf32>
    %182 = arith.divf %180, %181 : vector<1x128xf32>
    %183 = vector.extract_strided_slice %170 {offsets = [0, 256], sizes = [1, 128], strides = [1, 1]} : vector<1x512xf32> to vector<1x128xf32>
    %184 = math.tanh %183 : vector<1x128xf32>
    %185 = vector.extract_strided_slice %170 {offsets = [0, 384], sizes = [1, 128], strides = [1, 1]} : vector<1x512xf32> to vector<1x128xf32>
    %186 = arith.negf %185 : vector<1x128xf32>
    %187 = math.exp %186 : vector<1x128xf32>
    %cst_30 = arith.constant 1.000000e+00 : f32
    %188 = vector.broadcast %cst_30 : f32 to vector<1x128xf32>
    %189 = arith.addf %188, %187 : vector<1x128xf32>
    %190 = arith.divf %188, %189 : vector<1x128xf32>
    %191 = arith.mulf %182, %160 : vector<1x128xf32>
    %192 = arith.mulf %176, %184 : vector<1x128xf32>
    %193 = arith.addf %191, %192 : vector<1x128xf32>
    %194 = math.tanh %193 : vector<1x128xf32>
    %195 = arith.mulf %190, %194 : vector<1x128xf32>
    %196 = arith.index_cast %arg0 : i32 to index
    %c6 = arith.constant 6 : index
    %197 = memref.load %arg1[%196, %c6] : memref<4x8xi32, #tpu.memory_space<smem>>
    %198 = arith.index_cast %197 : i32 to index
    %c0_31 = arith.constant 0 : index
    %199 = vector.load %arg2[%198, %c0_31] : memref<50x512xf32, #tpu.memory_space<vmem>>, vector<1x512xf32>
    %200 = vector.extract_strided_slice %195 {offsets = [0, 0], sizes = [1, 32], strides = [1, 1]} : vector<1x128xf32> to vector<1x32xf32>
    %201 = arith.truncf %200 : vector<1x32xf32> to vector<1x32xbf16>
    %cst_32 = arith.constant dense<0.000000e+00> : vector<1x512xf32>
    %202 = tpu.matmul %201, %0, %cst_32 {dimension_numbers = #tpu.dot_dimension_numbers<[1], [0], [0], [1], [0, 0, 1, 1], [], []>} : vector<1x32xbf16>, vector<32x512xbf16>, vector<1x512xf32> -> vector<1x512xf32>
    %203 = arith.addf %199, %202 : vector<1x512xf32>
    %204 = vector.extract_strided_slice %203 {offsets = [0, 0], sizes = [1, 128], strides = [1, 1]} : vector<1x512xf32> to vector<1x128xf32>
    %205 = arith.negf %204 : vector<1x128xf32>
    %206 = math.exp %205 : vector<1x128xf32>
    %cst_33 = arith.constant 1.000000e+00 : f32
    %207 = vector.broadcast %cst_33 : f32 to vector<1x128xf32>
    %208 = arith.addf %207, %206 : vector<1x128xf32>
    %209 = arith.divf %207, %208 : vector<1x128xf32>
    %210 = vector.extract_strided_slice %203 {offsets = [0, 128], sizes = [1, 128], strides = [1, 1]} : vector<1x512xf32> to vector<1x128xf32>
    %211 = arith.negf %210 : vector<1x128xf32>
    %212 = math.exp %211 : vector<1x128xf32>
    %cst_34 = arith.constant 1.000000e+00 : f32
    %213 = vector.broadcast %cst_34 : f32 to vector<1x128xf32>
    %214 = arith.addf %213, %212 : vector<1x128xf32>
    %215 = arith.divf %213, %214 : vector<1x128xf32>
    %216 = vector.extract_strided_slice %203 {offsets = [0, 256], sizes = [1, 128], strides = [1, 1]} : vector<1x512xf32> to vector<1x128xf32>
    %217 = math.tanh %216 : vector<1x128xf32>
    %218 = vector.extract_strided_slice %203 {offsets = [0, 384], sizes = [1, 128], strides = [1, 1]} : vector<1x512xf32> to vector<1x128xf32>
    %219 = arith.negf %218 : vector<1x128xf32>
    %220 = math.exp %219 : vector<1x128xf32>
    %cst_35 = arith.constant 1.000000e+00 : f32
    %221 = vector.broadcast %cst_35 : f32 to vector<1x128xf32>
    %222 = arith.addf %221, %220 : vector<1x128xf32>
    %223 = arith.divf %221, %222 : vector<1x128xf32>
    %224 = arith.mulf %215, %193 : vector<1x128xf32>
    %225 = arith.mulf %209, %217 : vector<1x128xf32>
    %226 = arith.addf %224, %225 : vector<1x128xf32>
    %227 = math.tanh %226 : vector<1x128xf32>
    %228 = arith.mulf %223, %227 : vector<1x128xf32>
    %229 = arith.index_cast %arg0 : i32 to index
    %c7 = arith.constant 7 : index
    %230 = memref.load %arg1[%229, %c7] : memref<4x8xi32, #tpu.memory_space<smem>>
    %231 = arith.index_cast %230 : i32 to index
    %c0_36 = arith.constant 0 : index
    %232 = vector.load %arg2[%231, %c0_36] : memref<50x512xf32, #tpu.memory_space<vmem>>, vector<1x512xf32>
    %233 = vector.extract_strided_slice %228 {offsets = [0, 0], sizes = [1, 32], strides = [1, 1]} : vector<1x128xf32> to vector<1x32xf32>
    %234 = arith.truncf %233 : vector<1x32xf32> to vector<1x32xbf16>
    %cst_37 = arith.constant dense<0.000000e+00> : vector<1x512xf32>
    %235 = tpu.matmul %234, %0, %cst_37 {dimension_numbers = #tpu.dot_dimension_numbers<[1], [0], [0], [1], [0, 0, 1, 1], [], []>} : vector<1x32xbf16>, vector<32x512xbf16>, vector<1x512xf32> -> vector<1x512xf32>
    %236 = arith.addf %232, %235 : vector<1x512xf32>
    %237 = vector.extract_strided_slice %236 {offsets = [0, 0], sizes = [1, 128], strides = [1, 1]} : vector<1x512xf32> to vector<1x128xf32>
    %238 = arith.negf %237 : vector<1x128xf32>
    %239 = math.exp %238 : vector<1x128xf32>
    %cst_38 = arith.constant 1.000000e+00 : f32
    %240 = vector.broadcast %cst_38 : f32 to vector<1x128xf32>
    %241 = arith.addf %240, %239 : vector<1x128xf32>
    %242 = arith.divf %240, %241 : vector<1x128xf32>
    %243 = vector.extract_strided_slice %236 {offsets = [0, 128], sizes = [1, 128], strides = [1, 1]} : vector<1x512xf32> to vector<1x128xf32>
    %244 = arith.negf %243 : vector<1x128xf32>
    %245 = math.exp %244 : vector<1x128xf32>
    %cst_39 = arith.constant 1.000000e+00 : f32
    %246 = vector.broadcast %cst_39 : f32 to vector<1x128xf32>
    %247 = arith.addf %246, %245 : vector<1x128xf32>
    %248 = arith.divf %246, %247 : vector<1x128xf32>
    %249 = vector.extract_strided_slice %236 {offsets = [0, 256], sizes = [1, 128], strides = [1, 1]} : vector<1x512xf32> to vector<1x128xf32>
    %250 = math.tanh %249 : vector<1x128xf32>
    %251 = vector.extract_strided_slice %236 {offsets = [0, 384], sizes = [1, 128], strides = [1, 1]} : vector<1x512xf32> to vector<1x128xf32>
    %252 = arith.negf %251 : vector<1x128xf32>
    %253 = math.exp %252 : vector<1x128xf32>
    %cst_40 = arith.constant 1.000000e+00 : f32
    %254 = vector.broadcast %cst_40 : f32 to vector<1x128xf32>
    %255 = arith.addf %254, %253 : vector<1x128xf32>
    %256 = arith.divf %254, %255 : vector<1x128xf32>
    %257 = arith.mulf %248, %226 : vector<1x128xf32>
    %258 = arith.mulf %242, %250 : vector<1x128xf32>
    %259 = arith.addf %257, %258 : vector<1x128xf32>
    %260 = math.tanh %259 : vector<1x128xf32>
    %261 = arith.mulf %256, %260 : vector<1x128xf32>
    %262 = arith.index_cast %arg0 : i32 to index
    %c7_41 = arith.constant 7 : index
    %263 = memref.load %arg1[%262, %c7_41] : memref<4x8xi32, #tpu.memory_space<smem>>
    %264 = arith.index_cast %263 : i32 to index
    %c0_42 = arith.constant 0 : index
    %265 = vector.load %arg3[%264, %c0_42] : memref<50x512xf32, #tpu.memory_space<vmem>>, vector<1x512xf32>
    %266 = vector.extract_strided_slice %265 {offsets = [0, 0], sizes = [1, 128], strides = [1, 1]} : vector<1x512xf32> to vector<1x128xf32>
    %267 = arith.negf %266 : vector<1x128xf32>
    %268 = math.exp %267 : vector<1x128xf32>
    %cst_43 = arith.constant 1.000000e+00 : f32
    %269 = vector.broadcast %cst_43 : f32 to vector<1x128xf32>
    %270 = arith.addf %269, %268 : vector<1x128xf32>
    %271 = arith.divf %269, %270 : vector<1x128xf32>
    %272 = vector.extract_strided_slice %265 {offsets = [0, 128], sizes = [1, 128], strides = [1, 1]} : vector<1x512xf32> to vector<1x128xf32>
    %273 = arith.negf %272 : vector<1x128xf32>
    %274 = math.exp %273 : vector<1x128xf32>
    %cst_44 = arith.constant 1.000000e+00 : f32
    %275 = vector.broadcast %cst_44 : f32 to vector<1x128xf32>
    %276 = arith.addf %275, %274 : vector<1x128xf32>
    %277 = arith.divf %275, %276 : vector<1x128xf32>
    %278 = vector.extract_strided_slice %265 {offsets = [0, 256], sizes = [1, 128], strides = [1, 1]} : vector<1x512xf32> to vector<1x128xf32>
    %279 = math.tanh %278 : vector<1x128xf32>
    %280 = vector.extract_strided_slice %265 {offsets = [0, 384], sizes = [1, 128], strides = [1, 1]} : vector<1x512xf32> to vector<1x128xf32>
    %281 = arith.negf %280 : vector<1x128xf32>
    %282 = math.exp %281 : vector<1x128xf32>
    %cst_45 = arith.constant 1.000000e+00 : f32
    %283 = vector.broadcast %cst_45 : f32 to vector<1x128xf32>
    %284 = arith.addf %283, %282 : vector<1x128xf32>
    %285 = arith.divf %283, %284 : vector<1x128xf32>
    %286 = arith.mulf %277, %1 : vector<1x128xf32>
    %287 = arith.mulf %271, %279 : vector<1x128xf32>
    %288 = arith.addf %286, %287 : vector<1x128xf32>
    %289 = math.tanh %288 : vector<1x128xf32>
    %290 = arith.mulf %285, %289 : vector<1x128xf32>
    %291 = vector.extract_strided_slice %261 {offsets = [0, 0], sizes = [1, 32], strides = [1, 1]} : vector<1x128xf32> to vector<1x32xf32>
    %c0_46 = arith.constant 0 : index
    %c0_47 = arith.constant 0 : index
    %292 = vector.load %arg5[%c0_46, %c0_47] : memref<32x5xf32, #tpu.memory_space<vmem>>, vector<32x5xf32>
    %cst_48 = arith.constant dense<0.000000e+00> : vector<1x5xf32>
    %293 = tpu.matmul %291, %292, %cst_48 {dimension_numbers = #tpu.dot_dimension_numbers<[1], [0], [0], [1], [0, 0, 1, 1], [], []>} : vector<1x32xf32>, vector<32x5xf32>, vector<1x5xf32> -> vector<1x5xf32>
    %294 = vector.extract_strided_slice %290 {offsets = [0, 0], sizes = [1, 32], strides = [1, 1]} : vector<1x128xf32> to vector<1x32xf32>
    %c0_49 = arith.constant 0 : index
    %c0_50 = arith.constant 0 : index
    %295 = vector.load %arg6[%c0_49, %c0_50] : memref<32x5xf32, #tpu.memory_space<vmem>>, vector<32x5xf32>
    %cst_51 = arith.constant dense<0.000000e+00> : vector<1x5xf32>
    %296 = tpu.matmul %294, %295, %cst_51 {dimension_numbers = #tpu.dot_dimension_numbers<[1], [0], [0], [1], [0, 0, 1, 1], [], []>} : vector<1x32xf32>, vector<32x5xf32>, vector<1x5xf32> -> vector<1x5xf32>
    %297 = arith.addf %293, %296 : vector<1x5xf32>
    %c0_52 = arith.constant 0 : index
    %c0_53 = arith.constant 0 : index
    %298 = vector.load %arg7[%c0_52, %c0_53] : memref<1x5xf32, #tpu.memory_space<vmem>>, vector<1x5xf32>
    %299 = arith.addf %297, %298 : vector<1x5xf32>
    %cst_54 = arith.constant dense<0xFF800000> : vector<1xf32>
    %300 = vector.multi_reduction <maximumf>, %299, %cst_54 [1] : vector<1x5xf32> to vector<1xf32>
    %301 = vector.shape_cast %300 : vector<1xf32> to vector<1x1xf32>
    %302 = vector.broadcast %301 : vector<1x1xf32> to vector<1x5xf32>
    %303 = arith.subf %299, %302 : vector<1x5xf32>
    %304 = math.exp %303 : vector<1x5xf32>
    %cst_55 = arith.constant dense<0.000000e+00> : vector<1xf32>
    %305 = vector.multi_reduction <add>, %304, %cst_55 [1] : vector<1x5xf32> to vector<1xf32>
    %306 = vector.shape_cast %305 : vector<1xf32> to vector<1x1xf32>
    %307 = math.log %306 : vector<1x1xf32>
    %308 = vector.broadcast %307 : vector<1x1xf32> to vector<1x5xf32>
    %309 = arith.subf %303, %308 : vector<1x5xf32>
    %c0_56 = arith.constant 0 : index
    %c0_57 = arith.constant 0 : index
    %c0_58 = arith.constant 0 : index
    %310 = vector.load %arg8[%c0_56, %c0_57, %c0_58] : memref<1x1x5xf32, #tpu.memory_space<vmem>>, vector<1x1x5xf32>
    %311 = vector.shape_cast %310 : vector<1x1x5xf32> to vector<1x5xf32>
    %312 = vector.shape_cast %309 : vector<1x5xf32> to vector<1x1x5xf32>
    tpu.vector_store %arg8[%c0_56, %c0_57, %c0_58], %312 {strides = array<i32>} : memref<1x1x5xf32, #tpu.memory_space<vmem>>, vector<1x1x5xf32>,
    return
  }
  func.func @transform_0(%arg0: i32, %arg1: memref<4x8xi32, #tpu.memory_space<smem>>) -> (i32, i32) {
    %c0_i32 = arith.constant 0 : i32
    %c0_i32_0 = arith.constant 0 : i32
    %c0_i32_1 = arith.constant 0 : i32
    return %c0_i32, %c0_i32_0 : i32, i32
  }
  func.func @transform_1(%arg0: i32, %arg1: memref<4x8xi32, #tpu.memory_space<smem>>) -> (i32, i32) {
    %c0_i32 = arith.constant 0 : i32
    %c0_i32_0 = arith.constant 0 : i32
    %c0_i32_1 = arith.constant 0 : i32
    return %c0_i32, %c0_i32_0 : i32, i32
  }
  func.func @transform_2(%arg0: i32, %arg1: memref<4x8xi32, #tpu.memory_space<smem>>) -> (i32, i32) {
    %c0_i32 = arith.constant 0 : i32
    %c0_i32_0 = arith.constant 0 : i32
    %c0_i32_1 = arith.constant 0 : i32
    return %c0_i32, %c0_i32_0 : i32, i32
  }
  func.func @transform_3(%arg0: i32, %arg1: memref<4x8xi32, #tpu.memory_space<smem>>) -> (i32, i32) {
    %c0_i32 = arith.constant 0 : i32
    %c0_i32_0 = arith.constant 0 : i32
    %c0_i32_1 = arith.constant 0 : i32
    return %c0_i32, %c0_i32_0 : i32, i32
  }
  func.func @transform_4(%arg0: i32, %arg1: memref<4x8xi32, #tpu.memory_space<smem>>) -> (i32, i32) {
    %c0_i32 = arith.constant 0 : i32
    %c0_i32_0 = arith.constant 0 : i32
    %c0_i32_1 = arith.constant 0 : i32
    return %c0_i32, %c0_i32_0 : i32, i32
  }
  func.func @transform_5(%arg0: i32, %arg1: memref<4x8xi32, #tpu.memory_space<smem>>) -> (i32, i32) {
    %c0_i32 = arith.constant 0 : i32
    %c0_i32_0 = arith.constant 0 : i32
    %c0_i32_1 = arith.constant 0 : i32
    return %c0_i32, %c0_i32_0 : i32, i32
  }
  func.func @transform_6(%arg0: i32, %arg1: memref<4x8xi32, #tpu.memory_space<smem>>) -> (i32, i32, i32) {
    %c0_i32 = arith.constant 0 : i32
    %c0_i32_0 = arith.constant 0 : i32
    %c0_i32_1 = arith.constant 0 : i32
    return %arg0, %c0_i32, %c0_i32_0 : i32, i32, i32
  }
}

</mosaic_0001>

<llo_original>
// kernel: tpu_custom_call.1
$region0: #{tpu_custom_call.1}
  #allocation0 [shape = 'u32[]', space=smem, size = 0x4, offset = 0x4, fixed_abs, tag = 'smem constant byte address 0x4 - core index']
  #allocation1 [shape = 'u32[72,128]{1,0:T(1,128)}', space=vmem, size = 0x9000, scoped, tag = 'internal scratch']
  #allocation2 [shape = 's32[1]{0}', space=sflag, size = 0x4, scoped, tag = 'scoped memory for tpu_custom_call.1']
  #allocation3 [shape = 'u8[2048]{0}', space=smem, size = 0x800, scoped, tag = 'prefetched SMEM operand 0']
  %s0 = inlined_call_operand.vmem [shape: s32[4,8], index: 0, kind: input, shape index: {}]
  %s1 = inlined_call_operand.hbm [shape: f32[50,512], index: 1, kind: input, shape index: {}]
  %s2 = inlined_call_operand.hbm [shape: f32[50,512], index: 2, kind: input, shape index: {}]
  %s3 = inlined_call_operand.vmem [shape: bf16[32,512], index: 3, kind: input, shape index: {}]
  %s4 = inlined_call_operand.vmem [shape: f32[32,5], index: 4, kind: input, shape index: {}]
  %s5 = inlined_call_operand.vmem [shape: f32[32,5], index: 5, kind: input, shape index: {}]
  %s6 = inlined_call_operand.vmem [shape: f32[1,5], index: 6, kind: input, shape index: {}]
  %s7 = inlined_call_operand.hbm [shape: f32[4,1,5], index: 7, kind: output, shape index: {}]
  %s8 = sld [smem:[#allocation0]]
  $region65: #{tpu_custom_call.1} parent=0
    _
  %s10 = ssub.s32 1, %s8
  %s11 = scalar_select 0, %s10, %s8
  %s13 = sshll.u32 %s0, 4
  %s14 = int_to_ptr.vmem [resolvable:$true] %s13
  %16 = dma.vmem_to_smem %s14, 64, [#allocation3], [#allocation2]
  %18 = dma.done [#allocation2], 64
  %19 = sfence
  $region1: #{tpu_custom_call.1} parent=0
    #allocation4 [shape = 'u8[114688]{0}', space=vmem, size = 0x1c000, scoped, tag = 'input window, operand 1, single buffered']
    #allocation5 [shape = 's32[2]{0}', space=sflag, size = 0x8, scoped, tag = 'scoped memory for tpu_custom_call.1']
    #allocation6 [shape = 's32[2]{0}', space=sflag, size = 0x8, scoped, tag = 'scoped memory for tpu_custom_call.1']
    #allocation7 [shape = 'u8[114688]{0}', space=vmem, size = 0x1c000, scoped, tag = 'input window, operand 2, single buffered']
    #allocation8 [shape = 's32[1]{0}', space=sflag, size = 0x4, scoped, tag = 'scoped memory for tpu_custom_call.1']
    #allocation9 [shape = 'u8[1024]{0}', space=vmem, size = 0x400, scoped, tag = 'output window, operand 0']
    %20 = vsyncpa [#allocation5], 0
    %21 = vsyncpa [#allocation8], 0
    %22 = vsyncpa [#allocation6], 0
    %s23 = scalar_lea.sflag [#allocation6], 1
    %24 = vsyncpa %s23, 0
    loop: start=0, step=1, limit=6
    $region2: #{tpu_custom_call.1} parent=1 // loop_pre_header
      _
    $region3: #{tpu_custom_call.1} parent=1 // loop_header
      %s26 = sphi 0, %s30
      %p27 = scmp.ge.s32.totalorder %s26, 6
      %s34 = sphi 0, %s34
      %s36 = sphi 0, %s34
      %s37 = sphi 0, %s36
      %s51 = sphi 0, %s37
      %s55 = sphi 0, %s55
      %s57 = sphi 0, %s55
      %s58 = sphi 0, %s57
      %s72 = sphi 0, %s58
      %s76 = sphi 0, %s76
      %s78 = sphi 0, %s76
      %s79 = sphi 0, %s78
      %s93 = sphi 0, %s79
      %s97 = sphi 0, %s97
      %s99 = sphi 0, %s97
      %s100 = sphi 0, %s99
      %s114 = sphi 0, %s100
      %s118 = sphi 0, %s118
      %s120 = sphi 0, %s118
      %s121 = sphi 0, %s120
      %s135 = sphi 0, %s121
      %s139 = sphi 0, %s139
      %s141 = sphi 0, %s139
      %s142 = sphi 0, %s141
      %s156 = sphi 0, %s142
      %s162 = sphi 0, %s164
      %s165 = sphi 0, %s162
      %s166 = sphi 0, %s165
      %s182 = sphi 0, %s166
    $region4: #{tpu_custom_call.1} parent=1 // loop_header_branch
      %29 = sbr.rel (%p27) target = $region8
    $region5: #{tpu_custom_call.1} parent=1 // loop_body
      %s31 = ssub.s32 %s26, 1
      %s32 = ssub.s32 %s26, 2
      %s33 = sadd.s32 %s26, 1
      %s35 = sadd.s32 %s34, 1
      %p38 = scmp.eq.s32.totalorder %s26, 3
      %p39 = scmp.ne.s32.totalorder %s34, %s36
      %p40 = scmp.eq.s32.totalorder %s26, 0
      %p41 = por %p39, %p40
      %p42 = scmp.ne.s32.totalorder %s34, %s36
      %p43 = scmp.eq.s32.totalorder %s31, 3
      %p44 = por %p42, %p43
      %p45 = scmp.ne.s32.totalorder %s36, %s37
      %p46 = scmp.eq.s32.totalorder %s31, 0
      %p47 = por %p45, %p46
      %p48 = scmp.ne.s32.totalorder %s36, %s37
      %p49 = scmp.eq.s32.totalorder %s32, 3
      %p50 = por %p48, %p49
      %p52 = scmp.ne.s32.totalorder %s37, %s51
      %p53 = scmp.eq.s32.totalorder %s32, 0
      %p54 = por %p52, %p53
      %s56 = sadd.s32 %s55, 1
      %p59 = scmp.eq.s32.totalorder %s26, 3
      %p60 = scmp.ne.s32.totalorder %s55, %s57
      %p61 = scmp.eq.s32.totalorder %s26, 0
      %p62 = por %p60, %p61
      %p63 = scmp.ne.s32.totalorder %s55, %s57
      %p64 = scmp.eq.s32.totalorder %s31, 3
      %p65 = por %p63, %p64
      %p66 = scmp.ne.s32.totalorder %s57, %s58
      %p67 = scmp.eq.s32.totalorder %s31, 0
      %p68 = por %p66, %p67
      %p69 = scmp.ne.s32.totalorder %s57, %s58
      %p70 = scmp.eq.s32.totalorder %s32, 3
      %p71 = por %p69, %p70
      %p73 = scmp.ne.s32.totalorder %s58, %s72
      %p74 = scmp.eq.s32.totalorder %s32, 0
      %p75 = por %p73, %p74
      %s77 = sadd.s32 %s76, 1
      %p80 = scmp.eq.s32.totalorder %s26, 3
      %p81 = scmp.ne.s32.totalorder %s76, %s78
      %p82 = scmp.eq.s32.totalorder %s26, 0
      %p83 = por %p81, %p82
      %p84 = scmp.ne.s32.totalorder %s76, %s78
      %p85 = scmp.eq.s32.totalorder %s31, 3
      %p86 = por %p84, %p85
      %p87 = scmp.ne.s32.totalorder %s78, %s79
      %p88 = scmp.eq.s32.totalorder %s31, 0
      %p89 = por %p87, %p88
      %p90 = scmp.ne.s32.totalorder %s78, %s79
      %p91 = scmp.eq.s32.totalorder %s32, 3
      %p92 = por %p90, %p91
      %p94 = scmp.ne.s32.totalorder %s79, %s93
      %p95 = scmp.eq.s32.totalorder %s32, 0
      %p96 = por %p94, %p95
      %s98 = sadd.s32 %s97, 1
      %p101 = scmp.eq.s32.totalorder %s26, 3
      %p102 = scmp.ne.s32.totalorder %s97, %s99
      %p103 = scmp.eq.s32.totalorder %s26, 0
      %p104 = por %p102, %p103
      %p105 = scmp.ne.s32.totalorder %s97, %s99
      %p106 = scmp.eq.s32.totalorder %s31, 3
      %p107 = por %p105, %p106
      %p108 = scmp.ne.s32.totalorder %s99, %s100
      %p109 = scmp.eq.s32.totalorder %s31, 0
      %p110 = por %p108, %p109
      %p111 = scmp.ne.s32.totalorder %s99, %s100
      %p112 = scmp.eq.s32.totalorder %s32, 3
      %p113 = por %p111, %p112
      %p115 = scmp.ne.s32.totalorder %s100, %s114
      %p116 = scmp.eq.s32.totalorder %s32, 0
      %p117 = por %p115, %p116
      %s119 = sadd.s32 %s118, 1
      %p122 = scmp.eq.s32.totalorder %s26, 3
      %p123 = scmp.ne.s32.totalorder %s118, %s120
      %p124 = scmp.eq.s32.totalorder %s26, 0
      %p125 = por %p123, %p124
      %p126 = scmp.ne.s32.totalorder %s118, %s120
      %p127 = scmp.eq.s32.totalorder %s31, 3
      %p128 = por %p126, %p127
      %p129 = scmp.ne.s32.totalorder %s120, %s121
      %p130 = scmp.eq.s32.totalorder %s31, 0
      %p131 = por %p129, %p130
      %p132 = scmp.ne.s32.totalorder %s120, %s121
      %p133 = scmp.eq.s32.totalorder %s32, 3
      %p134 = por %p132, %p133
      %p136 = scmp.ne.s32.totalorder %s121, %s135
      %p137 = scmp.eq.s32.totalorder %s32, 0
      %p138 = por %p136, %p137
      %s140 = sadd.s32 %s139, 1
      %p143 = scmp.eq.s32.totalorder %s26, 3
      %p144 = scmp.ne.s32.totalorder %s139, %s141
      %p145 = scmp.eq.s32.totalorder %s26, 0
      %p146 = por %p144, %p145
      %p147 = scmp.ne.s32.totalorder %s139, %s141
      %p148 = scmp.eq.s32.totalorder %s31, 3
      %p149 = por %p147, %p148
      %p150 = scmp.ne.s32.totalorder %s141, %s142
      %p151 = scmp.eq.s32.totalorder %s31, 0
      %p152 = por %p150, %p151
      %p153 = scmp.ne.s32.totalorder %s141, %s142
      %p154 = scmp.eq.s32.totalorder %s32, 3
      %p155 = por %p153, %p154
      %p157 = scmp.ne.s32.totalorder %s142, %s156
      %p158 = scmp.eq.s32.totalorder %s32, 0
      %p159 = por %p157, %p158
      %s160 = ssub.s32 %s26, %s33
      %p161 = scmp.eq.s32.totalorder %s160, 0
      %s163 = sadd.s32 %s162, 1
      %s164 = scalar_select %p161, %s162, %s163
      %p167 = pneg %p161
      %p168 = scmp.eq.s32.totalorder %s26, 3
      %p169 = por %p167, %p168
      %p170 = scmp.ne.s32.totalorder %s162, %s165
      %p171 = scmp.eq.s32.totalorder %s26, 0
      %p172 = por %p170, %p171
      %p173 = scmp.ne.s32.totalorder %s162, %s165
      %p174 = scmp.eq.s32.totalorder %s31, 3
      %p175 = por %p173, %p174
      %p176 = scmp.ne.s32.totalorder %s165, %s166
      %p177 = scmp.eq.s32.totalorder %s31, 0
      %p178 = por %p176, %p177
      %p179 = scmp.ne.s32.totalorder %s165, %s166
      %p180 = scmp.eq.s32.totalorder %s32, 3
      %p181 = por %p179, %p180
      %p183 = scmp.ne.s32.totalorder %s166, %s182
      %p184 = scmp.eq.s32.totalorder %s32, 0
      %p185 = por %p183, %p184
      %p186 = scmp.le.s32.totalorder 1, %s26
      %p187 = scmp.lt.s32.totalorder %s26, 5
      %p188 = pnand %p186, %p187
      %p189 = pneg %p188
      // Predicated region
      $region9: #{tpu_custom_call.1} parent=5 // pred_check
        _
      $region10: #{tpu_custom_call.1} parent=5 // pred_check_branch
        %191 = sbr.rel (%p188) target = $region12
      $region11: #{tpu_custom_call.1} parent=5 // pred_region
        %s192 = ssub.s32 %s26, 1
        // Predicated region
        $region13: #{tpu_custom_call.1} parent=11 // pred_check
          %p193 = pneg %p47
        $region14: #{tpu_custom_call.1} parent=11 // pred_check_branch
          %195 = sbr.rel (%p193) target = $region16
        $region15: #{tpu_custom_call.1} parent=11 // pred_region
          %197 = vsyncadd [#allocation5], 0
          %s198 = sshll.u32 %s1, 4
          %s199 = int_to_ptr.hbm [resolvable:$true] %s198
          %s200 = sshll.u32 [#allocation4], 4
          %s201 = int_to_ptr.vmem [resolvable:$true] %s200
          %206 = dma.hbm_to_vmem [thread:$0]  %s199, 3584, %s201, [#allocation5], 512, 512, 32
        $region16: #{tpu_custom_call.1} parent=11 // pred_fallthru
          _
        // Predicated region
        $region17: #{tpu_custom_call.1} parent=11 // pred_check
          %p207 = pneg %p68
        $region18: #{tpu_custom_call.1} parent=11 // pred_check_branch
          %209 = sbr.rel (%p207) target = $region20
        $region19: #{tpu_custom_call.1} parent=11 // pred_region
          %211 = vsyncadd [#allocation8], 0
          %s212 = sshll.u32 %s2, 4
          %s213 = int_to_ptr.hbm [resolvable:$true] %s212
          %s214 = sshll.u32 [#allocation7], 4
          %s215 = int_to_ptr.vmem [resolvable:$true] %s214
          %220 = dma.hbm_to_vmem [thread:$0]  %s213, 3584, %s215, [#allocation8], 512, 512, 32
        $region20: #{tpu_custom_call.1} parent=11 // pred_fallthru
          _
        // Predicated region
        $region21: #{tpu_custom_call.1} parent=11 // pred_check
          %p221 = pneg %p89
        $region22: #{tpu_custom_call.1} parent=11 // pred_check_branch
          %223 = sbr.rel (%p221) target = $region24
        $region23: #{tpu_custom_call.1} parent=11 // pred_region
          _
        $region24: #{tpu_custom_call.1} parent=11 // pred_fallthru
          _
        // Predicated region
        $region25: #{tpu_custom_call.1} parent=11 // pred_check
          %p224 = pneg %p110
        $region26: #{tpu_custom_call.1} parent=11 // pred_check_branch
          %226 = sbr.rel (%p224) target = $region28
        $region27: #{tpu_custom_call.1} parent=11 // pred_region
          _
        $region28: #{tpu_custom_call.1} parent=11 // pred_fallthru
          _
        // Predicated region
        $region29: #{tpu_custom_call.1} parent=11 // pred_check
          %p227 = pneg %p131
        $region30: #{tpu_custom_call.1} parent=11 // pred_check_branch
          %229 = sbr.rel (%p227) target = $region32
        $region31: #{tpu_custom_call.1} parent=11 // pred_region
          _
        $region32: #{tpu_custom_call.1} parent=11 // pred_fallthru
          _
        // Predicated region
        $region33: #{tpu_custom_call.1} parent=11 // pred_check
          %p230 = pneg %p152
        $region34: #{tpu_custom_call.1} parent=11 // pred_check_branch
          %232 = sbr.rel (%p230) target = $region36
        $region35: #{tpu_custom_call.1} parent=11 // pred_region
          _
        $region36: #{tpu_custom_call.1} parent=11 // pred_fallthru
          _
      $region12: #{tpu_custom_call.1} parent=5 // pred_fallthru
        _
      %p233 = scmp.lt.s32.totalorder %s26, 4
      // Predicated region
      $region37: #{tpu_custom_call.1} parent=5 // pred_check
        %p234 = pneg %p233
      $region38: #{tpu_custom_call.1} parent=5 // pred_check_branch
        %236 = sbr.rel (%p234) target = $region40
      $region39: #{tpu_custom_call.1} parent=5 // pred_region
        _
      $region40: #{tpu_custom_call.1} parent=5 // pred_fallthru
        _
      %p237 = scmp.le.s32.totalorder 1, %s26
      %p238 = scmp.lt.s32.totalorder %s26, 5
      %p239 = pnand %p237, %p238
      %p240 = pneg %p239
      // Predicated region
      $region41: #{tpu_custom_call.1} parent=5 // pred_check
        _
      $region42: #{tpu_custom_call.1} parent=5 // pred_check_branch
        %242 = sbr.rel (%p239) target = $region44
      $region43: #{tpu_custom_call.1} parent=5 // pred_region
        %s243 = ssub.s32 %s26, 1
        // Predicated region
        $region45: #{tpu_custom_call.1} parent=43 // pred_check
          %p244 = pneg %p47
        $region46: #{tpu_custom_call.1} parent=43 // pred_check_branch
          %246 = sbr.rel (%p244) target = $region48
        $region47: #{tpu_custom_call.1} parent=43 // pred_region
          %248 = dma.done [#allocation5], 3584
        $region48: #{tpu_custom_call.1} parent=43 // pred_fallthru
          _
        // Predicated region
        $region49: #{tpu_custom_call.1} parent=43 // pred_check
          %p249 = pneg %p68
        $region50: #{tpu_custom_call.1} parent=43 // pred_check_branch
          %251 = sbr.rel (%p249) target = $region52
        $region51: #{tpu_custom_call.1} parent=43 // pred_region
          %253 = dma.done [#allocation8], 3584
        $region52: #{tpu_custom_call.1} parent=43 // pred_fallthru
          _
        %p254 = pneg %p47
        %p255 = pneg %p44
        %p256 = pneg %p68
        %p257 = pneg %p65
        %p258 = pneg %p89
        %p259 = pneg %p86
        %p260 = pneg %p110
        %p261 = pneg %p107
        %p262 = pneg %p131
        %p263 = pneg %p128
        %p264 = pneg %p152
        %p265 = pneg %p149
        %p266 = pneg %p178
        %p267 = pneg %p175
        %s268 = sand.u32 %s165, 1
        %s269 = scalar_lea.sflag [#allocation6], %s268
        %s270 = sand.u32 %s165, 1
        %s271 = scalar_lea.vmem [#allocation9], %s270
        %v273 = vld [vmem:[%s3] sm:$0xff]
        %v274 = vld [vmem:[%s3 + $0x8] sm:$0xff]
        %v275 = vld [vmem:[%s3 + $0x10] sm:$0xff]
        %v276 = vld [vmem:[%s3 + $0x18] sm:$0xff]
        %v277 = vld [vmem:[%s3 + $0x20] sm:$0xff]
        %v278 = vld [vmem:[%s3 + $0x28] sm:$0xff]
        %v279 = vld [vmem:[%s3 + $0x30] sm:$0xff]
        %v280 = vld [vmem:[%s3 + $0x38] sm:$0xff]
        %s281 = smul.u32 %s31, 128
        %s282 = sld [smem:[#allocation3 + %s281]]
        %s283 = sshra.s32 %s282, 3
        %s284 = sand.u32 %s282, 7
        %s285 = sshra.s32 %s282, 3
        %s286 = sand.u32 %s282, 7
        %s287 = smul.u32 %s283, 4
        %s288 = smul.u32 %s287, 8
        %s289 = sadd.s32 %s288, %s286
        %s290 = scalar_lea.vmem [#allocation4], %s289
        %v291 = vld [vmem:[%s290] ss:$8 sm:$0xf]
        %v292 = vxor.u32 %v291, 2147483648
        %v293 = vmul.f32 %v292, 1.442695
        %v294 = vpow.pop %v293
        %v295 = vadd.f32 %v294, 1.0
        %v296 = vrcp.pop %v295
        %v297 = vmul.f32 %v295, %v296
        %v298 = vsub.f32 1.0, %v297
        %v299 = vmul.f32 %v296, %v298
        %v300 = vadd.f32 %v296, %v299
        %vm301 = vweird.f32 %v295
        %vm302 = vweird.f32 %v296
        %vm303 = vmor %vm301, %vm302
        %v304 = vsel %vm303, %v296, %v300
        %v305 = vand.u32 2147483647, %v295
        %vm306 = vcmp.eq.f32.partialorder %v305, 8.507059e+37
        %v307 = vand.u32 %v295, 2147483648
        %v308 = vor.u32 1.1754944e-38, %v307
        %v309 = vsel %vm306, %v308, %v304
        %v310 = vmul.f32 1.0, %v309
        %v312 = vrot.slane %v291, 1
        %v314 = vxor.u32 %v312, 2147483648
        %v315 = vmul.f32 %v314, 1.442695
        %v316 = vpow.pop %v315
        %v317 = vadd.f32 %v316, 1.0
        %v318 = vrcp.pop %v317
        %v319 = vmul.f32 %v317, %v318
        %v320 = vsub.f32 1.0, %v319
        %v321 = vmul.f32 %v318, %v320
        %v322 = vadd.f32 %v318, %v321
        %vm323 = vweird.f32 %v317
        %vm324 = vweird.f32 %v318
        %vm325 = vmor %vm323, %vm324
        %v326 = vsel %vm325, %v318, %v322
        %v327 = vand.u32 2147483647, %v317
        %vm328 = vcmp.eq.f32.partialorder %v327, 8.507059e+37
        %v329 = vand.u32 %v317, 2147483648
        %v330 = vor.u32 1.1754944e-38, %v329
        %v331 = vsel %vm328, %v330, %v326
        %v332 = vmul.f32 1.0, %v331
        %v333 = vrot.slane %v291, 2
        %v335 = vtanh.pop %v333
        %v336 = vrot.slane %v291, 3
        %v338 = vxor.u32 %v336, 2147483648
        %v339 = vmul.f32 %v338, 1.442695
        %v340 = vpow.pop %v339
        %v341 = vadd.f32 %v340, 1.0
        %v342 = vrcp.pop %v341
        %v343 = vmul.f32 %v341, %v342
        %v344 = vsub.f32 1.0, %v343
        %v345 = vmul.f32 %v342, %v344
        %v346 = vadd.f32 %v342, %v345
        %vm347 = vweird.f32 %v341
        %vm348 = vweird.f32 %v342
        %vm349 = vmor %vm347, %vm348
        %v350 = vsel %vm349, %v342, %v346
        %v351 = vand.u32 2147483647, %v341
        %vm352 = vcmp.eq.f32.partialorder %v351, 8.507059e+37
        %v353 = vand.u32 %v341, 2147483648
        %v354 = vor.u32 1.1754944e-38, %v353
        %v355 = vsel %vm352, %v354, %v350
        %v356 = vmul.f32 1.0, %v355
        %v357 = vmul.f32 %v332, 0.0
        %v358 = vmul.f32 %v310, %v335
        %v359 = vadd.f32 %v357, %v358
        %v360 = vtanh.pop %v359
        %v361 = vmul.f32 %v356, %v360
        %s362 = sadd.s32 %s281, 1
        %s363 = sld [smem:[#allocation3 + %s362]]
        %s364 = sshra.s32 %s363, 3
        %s365 = sand.u32 %s363, 7
        %s366 = sshra.s32 %s363, 3
        %s367 = sand.u32 %s363, 7
        %s368 = smul.u32 %s364, 4
        %s369 = smul.u32 %s368, 8
        %s370 = sadd.s32 %s369, %s367
        %s371 = scalar_lea.vmem [#allocation4], %s370
        %v372 = vld [vmem:[%s371] ss:$8 sm:$0xf]
        %v373 = vpack.c.bf16 %v361, %v361
        %v382 = vunpack.c.l.b16 %v273
        %v383 = vunpack.c.h.b16 %v273
        %v384 = vunpack.c.l.b16 %v274
        %v385 = vunpack.c.h.b16 %v274
        %v386 = vunpack.c.l.b16 %v275
        %v387 = vunpack.c.h.b16 %v275
        %v388 = vunpack.c.l.b16 %v276
        %v389 = vunpack.c.h.b16 %v276
        %v390 = vunpack.c.l.b16 %v277
        %v391 = vunpack.c.h.b16 %v277
        %v392 = vunpack.c.l.b16 %v278
        %v393 = vunpack.c.h.b16 %v278
        %v394 = vunpack.c.l.b16 %v279
        %v395 = vunpack.c.h.b16 %v279
        %v396 = vunpack.c.l.b16 %v280
        %v397 = vunpack.c.h.b16 %v280
        %v398 = vpack.c.b16 %v386, %v382
        %v399 = vpack.c.b16 %v387, %v383
        %v400 = vpack.c.b16 %v388, %v384
        %v401 = vpack.c.b16 %v389, %v385
        %v402 = vpack.c.b16 %v394, %v390
        %v403 = vpack.c.b16 %v395, %v391
        %v404 = vpack.c.b16 %v396, %v392
        %v405 = vpack.c.b16 %v397, %v393
        %vm414 = vcmask 261120
        %v416 = vsel %vm414, %v373, 0
        %418 = vmatpush.bf16.msra.mxu0 0
        %419 = vmatpush.bf16.msra.mxu0 0
        %420 = vmatpush.bf16.msra.mxu0 0
        %421 = vmatpush.bf16.msra.mxu0 0
        %422 = vmatpush.bf16.msra.mxu0 0
        %423 = vmatpush.bf16.msra.mxu0 0
        %424 = vmatpush.bf16.msra.mxu0 %v402
        %425 = vmatpush.bf16.msra.mxu0 %v398
        %426 = vmatmul.bf16.gmra.mxu0 %v416
        %v427 = vpop.f32.mrf.mxu0
        %v428 = vadd.f32 0.0, %v427
        %v429 = vpop.f32.mrf.mxu0
        %430 = vdwg.mxu0
        %431 = vmatpush.bf16.msra.mxu0 0
        %432 = vmatpush.bf16.msra.mxu0 0
        %433 = vmatpush.bf16.msra.mxu0 0
        %434 = vmatpush.bf16.msra.mxu0 0
        %435 = vmatpush.bf16.msra.mxu0 0
        %436 = vmatpush.bf16.msra.mxu0 0
        %437 = vmatpush.bf16.msra.mxu0 %v403
        %438 = vmatpush.bf16.msra.mxu0 %v399
        %439 = vmatmul.bf16.gmra.mxu0 %v416
        %v440 = vpop.f32.mrf.mxu0
        %v441 = vadd.f32 0.0, %v440
        %v442 = vpop.f32.mrf.mxu0
        %443 = vdwg.mxu0
        %444 = vmatpush.bf16.msra.mxu0 0
        %445 = vmatpush.bf16.msra.mxu0 0
        %446 = vmatpush.bf16.msra.mxu0 0
        %447 = vmatpush.bf16.msra.mxu0 0
        %448 = vmatpush.bf16.msra.mxu0 0
        %449 = vmatpush.bf16.msra.mxu0 0
        %450 = vmatpush.bf16.msra.mxu0 %v404
        %451 = vmatpush.bf16.msra.mxu0 %v400
        %452 = vmatmul.bf16.gmra.mxu0 %v416
        %v453 = vpop.f32.mrf.mxu0
        %v454 = vadd.f32 0.0, %v453
        %v455 = vpop.f32.mrf.mxu0
        %456 = vdwg.mxu0
        %457 = vmatpush.bf16.msra.mxu0 0
        %458 = vmatpush.bf16.msra.mxu0 0
        %459 = vmatpush.bf16.msra.mxu0 0
        %460 = vmatpush.bf16.msra.mxu0 0
        %461 = vmatpush.bf16.msra.mxu0 0
        %462 = vmatpush.bf16.msra.mxu0 0
        %463 = vmatpush.bf16.msra.mxu0 %v405
        %464 = vmatpush.bf16.msra.mxu0 %v401
        %465 = vmatmul.bf16.gmra.mxu0 %v416
        %v466 = vpop.f32.mrf.mxu0
        %v467 = vadd.f32 0.0, %v466
        %v468 = vpop.f32.mrf.mxu0
        %469 = vdwg.mxu0
        %v474 = vrot.slane %v441, 7
        %v475 = vrot.slane %v454, 6
        %v476 = vrot.slane %v467, 5
        %vm477 = vcmask 1040384
        %v478 = vsel %vm477, %v428, %v474
        %vm479 = vcmask 1042434
        %v480 = vsel %vm479, %v475, %v476
        %vm481 = vcmask 1041408
        %v482 = vsel %vm481, %v478, %v480
        %v484 = vadd.f32 %v372, %v482
        %v485 = vxor.u32 %v484, 2147483648
        %v486 = vmul.f32 %v485, 1.442695
        %v487 = vpow.pop %v486
        %v488 = vadd.f32 %v487, 1.0
        %v489 = vrcp.pop %v488
        %v490 = vmul.f32 %v488, %v489
        %v491 = vsub.f32 1.0, %v490
        %v492 = vmul.f32 %v489, %v491
        %v493 = vadd.f32 %v489, %v492
        %vm494 = vweird.f32 %v488
        %vm495 = vweird.f32 %v489
        %vm496 = vmor %vm494, %vm495
        %v497 = vsel %vm496, %v489, %v493
        %v498 = vand.u32 2147483647, %v488
        %vm499 = vcmp.eq.f32.partialorder %v498, 8.507059e+37
        %v500 = vand.u32 %v488, 2147483648
        %v501 = vor.u32 1.1754944e-38, %v500
        %v502 = vsel %vm499, %v501, %v497
        %v503 = vmul.f32 1.0, %v502
        %v505 = vrot.slane %v484, 1
        %v507 = vxor.u32 %v505, 2147483648
        %v508 = vmul.f32 %v507, 1.442695
        %v509 = vpow.pop %v508
        %v510 = vadd.f32 %v509, 1.0
        %v511 = vrcp.pop %v510
        %v512 = vmul.f32 %v510, %v511
        %v513 = vsub.f32 1.0, %v512
        %v514 = vmul.f32 %v511, %v513
        %v515 = vadd.f32 %v511, %v514
        %vm516 = vweird.f32 %v510
        %vm517 = vweird.f32 %v511
        %vm518 = vmor %vm516, %vm517
        %v519 = vsel %vm518, %v511, %v515
        %v520 = vand.u32 2147483647, %v510
        %vm521 = vcmp.eq.f32.partialorder %v520, 8.507059e+37
        %v522 = vand.u32 %v510, 2147483648
        %v523 = vor.u32 1.1754944e-38, %v522
        %v524 = vsel %vm521, %v523, %v519
        %v525 = vmul.f32 1.0, %v524
        %v526 = vrot.slane %v484, 2
        %v528 = vtanh.pop %v526
        %v529 = vrot.slane %v484, 3
        %v531 = vxor.u32 %v529, 2147483648
        %v532 = vmul.f32 %v531, 1.442695
        %v533 = vpow.pop %v532
        %v534 = vadd.f32 %v533, 1.0
        %v535 = vrcp.pop %v534
        %v536 = vmul.f32 %v534, %v535
        %v537 = vsub.f32 1.0, %v536
        %v538 = vmul.f32 %v535, %v537
        %v539 = vadd.f32 %v535, %v538
        %vm540 = vweird.f32 %v534
        %vm541 = vweird.f32 %v535
        %vm542 = vmor %vm540, %vm541
        %v543 = vsel %vm542, %v535, %v539
        %v544 = vand.u32 2147483647, %v534
        %vm545 = vcmp.eq.f32.partialorder %v544, 8.507059e+37
        %v546 = vand.u32 %v534, 2147483648
        %v547 = vor.u32 1.1754944e-38, %v546
        %v548 = vsel %vm545, %v547, %v543
        %v549 = vmul.f32 1.0, %v548
        %v550 = vmul.f32 %v525, %v359
        %v551 = vmul.f32 %v503, %v528
        %v552 = vadd.f32 %v550, %v551
        %v553 = vtanh.pop %v552
        %v554 = vmul.f32 %v549, %v553
        %s555 = sadd.s32 %s281, 2
        %s556 = sld [smem:[#allocation3 + %s555]]
        %s557 = sshra.s32 %s556, 3
        %s558 = sand.u32 %s556, 7
        %s559 = sshra.s32 %s556, 3
        %s560 = sand.u32 %s556, 7
        %s561 = smul.u32 %s557, 4
        %s562 = smul.u32 %s561, 8
        %s563 = sadd.s32 %s562, %s560
        %s564 = scalar_lea.vmem [#allocation4], %s563
        %v565 = vld [vmem:[%s564] ss:$8 sm:$0xf]
        %v566 = vpack.c.bf16 %v554, %v554
        %v568 = vsel %vm414, %v566, 0
        %570 = vmatpush.bf16.msra.mxu0 0
        %571 = vmatpush.bf16.msra.mxu0 0
        %572 = vmatpush.bf16.msra.mxu0 0
        %573 = vmatpush.bf16.msra.mxu0 0
        %574 = vmatpush.bf16.msra.mxu0 0
        %575 = vmatpush.bf16.msra.mxu0 0
        %576 = vmatpush.bf16.msra.mxu0 %v402
        %577 = vmatpush.bf16.msra.mxu0 %v398
        %578 = vmatmul.bf16.gmra.mxu0 %v568
        %v579 = vpop.f32.mrf.mxu0
        %v580 = vadd.f32 0.0, %v579
        %v581 = vpop.f32.mrf.mxu0
        %582 = vdwg.mxu0
        %583 = vmatpush.bf16.msra.mxu0 0
        %584 = vmatpush.bf16.msra.mxu0 0
        %585 = vmatpush.bf16.msra.mxu0 0
        %586 = vmatpush.bf16.msra.mxu0 0
        %587 = vmatpush.bf16.msra.mxu0 0
        %588 = vmatpush.bf16.msra.mxu0 0
        %589 = vmatpush.bf16.msra.mxu0 %v403
        %590 = vmatpush.bf16.msra.mxu0 %v399
        %591 = vmatmul.bf16.gmra.mxu0 %v568
        %v592 = vpop.f32.mrf.mxu0
        %v593 = vadd.f32 0.0, %v592
        %v594 = vpop.f32.mrf.mxu0
        %595 = vdwg.mxu0
        %596 = vmatpush.bf16.msra.mxu0 0
        %597 = vmatpush.bf16.msra.mxu0 0
        %598 = vmatpush.bf16.msra.mxu0 0
        %599 = vmatpush.bf16.msra.mxu0 0
        %600 = vmatpush.bf16.msra.mxu0 0
        %601 = vmatpush.bf16.msra.mxu0 0
        %602 = vmatpush.bf16.msra.mxu0 %v404
        %603 = vmatpush.bf16.msra.mxu0 %v400
        %604 = vmatmul.bf16.gmra.mxu0 %v568
        %v605 = vpop.f32.mrf.mxu0
        %v606 = vadd.f32 0.0, %v605
        %v607 = vpop.f32.mrf.mxu0
        %608 = vdwg.mxu0
        %609 = vmatpush.bf16.msra.mxu0 0
        %610 = vmatpush.bf16.msra.mxu0 0
        %611 = vmatpush.bf16.msra.mxu0 0
        %612 = vmatpush.bf16.msra.mxu0 0
        %613 = vmatpush.bf16.msra.mxu0 0
        %614 = vmatpush.bf16.msra.mxu0 0
        %615 = vmatpush.bf16.msra.mxu0 %v405
        %616 = vmatpush.bf16.msra.mxu0 %v401
        %617 = vmatmul.bf16.gmra.mxu0 %v568
        %v618 = vpop.f32.mrf.mxu0
        %v619 = vadd.f32 0.0, %v618
        %v620 = vpop.f32.mrf.mxu0
        %621 = vdwg.mxu0
        %v626 = vrot.slane %v593, 7
        %v627 = vrot.slane %v606, 6
        %v628 = vrot.slane %v619, 5
        %v629 = vsel %vm477, %v580, %v626
        %v630 = vsel %vm479, %v627, %v628
        %v631 = vsel %vm481, %v629, %v630
        %v633 = vadd.f32 %v565, %v631
        %v634 = vxor.u32 %v633, 2147483648
        %v635 = vmul.f32 %v634, 1.442695
        %v636 = vpow.pop %v635
        %v637 = vadd.f32 %v636, 1.0
        %v638 = vrcp.pop %v637
        %v639 = vmul.f32 %v637, %v638
        %v640 = vsub.f32 1.0, %v639
        %v641 = vmul.f32 %v638, %v640
        %v642 = vadd.f32 %v638, %v641
        %vm643 = vweird.f32 %v637
        %vm644 = vweird.f32 %v638
        %vm645 = vmor %vm643, %vm644
        %v646 = vsel %vm645, %v638, %v642
        %v647 = vand.u32 2147483647, %v637
        %vm648 = vcmp.eq.f32.partialorder %v647, 8.507059e+37
        %v649 = vand.u32 %v637, 2147483648
        %v650 = vor.u32 1.1754944e-38, %v649
        %v651 = vsel %vm648, %v650, %v646
        %v652 = vmul.f32 1.0, %v651
        %v654 = vrot.slane %v633, 1
        %v656 = vxor.u32 %v654, 2147483648
        %v657 = vmul.f32 %v656, 1.442695
        %v658 = vpow.pop %v657
        %v659 = vadd.f32 %v658, 1.0
        %v660 = vrcp.pop %v659
        %v661 = vmul.f32 %v659, %v660
        %v662 = vsub.f32 1.0, %v661
        %v663 = vmul.f32 %v660, %v662
        %v664 = vadd.f32 %v660, %v663
        %vm665 = vweird.f32 %v659
        %vm666 = vweird.f32 %v660
        %vm667 = vmor %vm665, %vm666
        %v668 = vsel %vm667, %v660, %v664
        %v669 = vand.u32 2147483647, %v659
        %vm670 = vcmp.eq.f32.partialorder %v669, 8.507059e+37
        %v671 = vand.u32 %v659, 2147483648
        %v672 = vor.u32 1.1754944e-38, %v671
        %v673 = vsel %vm670, %v672, %v668
        %v674 = vmul.f32 1.0, %v673
        %v675 = vrot.slane %v633, 2
        %v677 = vtanh.pop %v675
        %v678 = vrot.slane %v633, 3
        %v680 = vxor.u32 %v678, 2147483648
        %v681 = vmul.f32 %v680, 1.442695
        %v682 = vpow.pop %v681
        %v683 = vadd.f32 %v682, 1.0
        %v684 = vrcp.pop %v683
        %v685 = vmul.f32 %v683, %v684
        %v686 = vsub.f32 1.0, %v685
        %v687 = vmul.f32 %v684, %v686
        %v688 = vadd.f32 %v684, %v687
        %vm689 = vweird.f32 %v683
        %vm690 = vweird.f32 %v684
        %vm691 = vmor %vm689, %vm690
        %v692 = vsel %vm691, %v684, %v688
        %v693 = vand.u32 2147483647, %v683
        %vm694 = vcmp.eq.f32.partialorder %v693, 8.507059e+37
        %v695 = vand.u32 %v683, 2147483648
        %v696 = vor.u32 1.1754944e-38, %v695
        %v697 = vsel %vm694, %v696, %v692
        %v698 = vmul.f32 1.0, %v697
        %v699 = vmul.f32 %v674, %v552
        %v700 = vmul.f32 %v652, %v677
        %v701 = vadd.f32 %v699, %v700
        %v702 = vtanh.pop %v701
        %v703 = vmul.f32 %v698, %v702
        %s704 = sadd.s32 %s281, 3
        %s705 = sld [smem:[#allocation3 + %s704]]
        %s706 = sshra.s32 %s705, 3
        %s707 = sand.u32 %s705, 7
        %s708 = sshra.s32 %s705, 3
        %s709 = sand.u32 %s705, 7
        %s710 = smul.u32 %s706, 4
        %s711 = smul.u32 %s710, 8
        %s712 = sadd.s32 %s711, %s709
        %s713 = scalar_lea.vmem [#allocation4], %s712
        %v714 = vld [vmem:[%s713] ss:$8 sm:$0xf]
        %v715 = vpack.c.bf16 %v703, %v703
        %v717 = vsel %vm414, %v715, 0
        %719 = vmatpush.bf16.msra.mxu0 0
        %720 = vmatpush.bf16.msra.mxu0 0
        %721 = vmatpush.bf16.msra.mxu0 0
        %722 = vmatpush.bf16.msra.mxu0 0
        %723 = vmatpush.bf16.msra.mxu0 0
        %724 = vmatpush.bf16.msra.mxu0 0
        %725 = vmatpush.bf16.msra.mxu0 %v402
        %726 = vmatpush.bf16.msra.mxu0 %v398
        %727 = vmatmul.bf16.gmra.mxu0 %v717
        %v728 = vpop.f32.mrf.mxu0
        %v729 = vadd.f32 0.0, %v728
        %v730 = vpop.f32.mrf.mxu0
        %731 = vdwg.mxu0
        %732 = vmatpush.bf16.msra.mxu0 0
        %733 = vmatpush.bf16.msra.mxu0 0
        %734 = vmatpush.bf16.msra.mxu0 0
        %735 = vmatpush.bf16.msra.mxu0 0
        %736 = vmatpush.bf16.msra.mxu0 0
        %737 = vmatpush.bf16.msra.mxu0 0
        %738 = vmatpush.bf16.msra.mxu0 %v403
        %739 = vmatpush.bf16.msra.mxu0 %v399
        %740 = vmatmul.bf16.gmra.mxu0 %v717
        %v741 = vpop.f32.mrf.mxu0
        %v742 = vadd.f32 0.0, %v741
        %v743 = vpop.f32.mrf.mxu0
        %744 = vdwg.mxu0
        %745 = vmatpush.bf16.msra.mxu0 0
        %746 = vmatpush.bf16.msra.mxu0 0
        %747 = vmatpush.bf16.msra.mxu0 0
        %748 = vmatpush.bf16.msra.mxu0 0
        %749 = vmatpush.bf16.msra.mxu0 0
        %750 = vmatpush.bf16.msra.mxu0 0
        %751 = vmatpush.bf16.msra.mxu0 %v404
        %752 = vmatpush.bf16.msra.mxu0 %v400
        %753 = vmatmul.bf16.gmra.mxu0 %v717
        %v754 = vpop.f32.mrf.mxu0
        %v755 = vadd.f32 0.0, %v754
        %v756 = vpop.f32.mrf.mxu0
        %757 = vdwg.mxu0
        %758 = vmatpush.bf16.msra.mxu0 0
        %759 = vmatpush.bf16.msra.mxu0 0
        %760 = vmatpush.bf16.msra.mxu0 0
        %761 = vmatpush.bf16.msra.mxu0 0
        %762 = vmatpush.bf16.msra.mxu0 0
        %763 = vmatpush.bf16.msra.mxu0 0
        %764 = vmatpush.bf16.msra.mxu0 %v405
        %765 = vmatpush.bf16.msra.mxu0 %v401
        %766 = vmatmul.bf16.gmra.mxu0 %v717
        %v767 = vpop.f32.mrf.mxu0
        %v768 = vadd.f32 0.0, %v767
        %v769 = vpop.f32.mrf.mxu0
        %770 = vdwg.mxu0
        %v775 = vrot.slane %v742, 7
        %v776 = vrot.slane %v755, 6
        %v777 = vrot.slane %v768, 5
        %v778 = vsel %vm477, %v729, %v775
        %v779 = vsel %vm479, %v776, %v777
        %v780 = vsel %vm481, %v778, %v779
        %v782 = vadd.f32 %v714, %v780
        %v783 = vxor.u32 %v782, 2147483648
        %v784 = vmul.f32 %v783, 1.442695
        %v785 = vpow.pop %v784
        %v786 = vadd.f32 %v785, 1.0
        %v787 = vrcp.pop %v786
        %v788 = vmul.f32 %v786, %v787
        %v789 = vsub.f32 1.0, %v788
        %v790 = vmul.f32 %v787, %v789
        %v791 = vadd.f32 %v787, %v790
        %vm792 = vweird.f32 %v786
        %vm793 = vweird.f32 %v787
        %vm794 = vmor %vm792, %vm793
        %v795 = vsel %vm794, %v787, %v791
        %v796 = vand.u32 2147483647, %v786
        %vm797 = vcmp.eq.f32.partialorder %v796, 8.507059e+37
        %v798 = vand.u32 %v786, 2147483648
        %v799 = vor.u32 1.1754944e-38, %v798
        %v800 = vsel %vm797, %v799, %v795
        %v801 = vmul.f32 1.0, %v800
        %v803 = vrot.slane %v782, 1
        %v805 = vxor.u32 %v803, 2147483648
        %v806 = vmul.f32 %v805, 1.442695
        %v807 = vpow.pop %v806
        %v808 = vadd.f32 %v807, 1.0
        %v809 = vrcp.pop %v808
        %v810 = vmul.f32 %v808, %v809
        %v811 = vsub.f32 1.0, %v810
        %v812 = vmul.f32 %v809, %v811
        %v813 = vadd.f32 %v809, %v812
        %vm814 = vweird.f32 %v808
        %vm815 = vweird.f32 %v809
        %vm816 = vmor %vm814, %vm815
        %v817 = vsel %vm816, %v809, %v813
        %v818 = vand.u32 2147483647, %v808
        %vm819 = vcmp.eq.f32.partialorder %v818, 8.507059e+37
        %v820 = vand.u32 %v808, 2147483648
        %v821 = vor.u32 1.1754944e-38, %v820
        %v822 = vsel %vm819, %v821, %v817
        %v823 = vmul.f32 1.0, %v822
        %v824 = vrot.slane %v782, 2
        %v826 = vtanh.pop %v824
        %v827 = vrot.slane %v782, 3
        %v829 = vxor.u32 %v827, 2147483648
        %v830 = vmul.f32 %v829, 1.442695
        %v831 = vpow.pop %v830
        %v832 = vadd.f32 %v831, 1.0
        %v833 = vrcp.pop %v832
        %v834 = vmul.f32 %v832, %v833
        %v835 = vsub.f32 1.0, %v834
        %v836 = vmul.f32 %v833, %v835
        %v837 = vadd.f32 %v833, %v836
        %vm838 = vweird.f32 %v832
        %vm839 = vweird.f32 %v833
        %vm840 = vmor %vm838, %vm839
        %v841 = vsel %vm840, %v833, %v837
        %v842 = vand.u32 2147483647, %v832
        %vm843 = vcmp.eq.f32.partialorder %v842, 8.507059e+37
        %v844 = vand.u32 %v832, 2147483648
        %v845 = vor.u32 1.1754944e-38, %v844
        %v846 = vsel %vm843, %v845, %v841
        %v847 = vmul.f32 1.0, %v846
        %v848 = vmul.f32 %v823, %v701
        %v849 = vmul.f32 %v801, %v826
        %v850 = vadd.f32 %v848, %v849
        %v851 = vtanh.pop %v850
        %v852 = vmul.f32 %v847, %v851
        %s853 = sadd.s32 %s281, 4
        %s854 = sld [smem:[#allocation3 + %s853]]
        %s855 = sshra.s32 %s854, 3
        %s856 = sand.u32 %s854, 7
        %s857 = sshra.s32 %s854, 3
        %s858 = sand.u32 %s854, 7
        %s859 = smul.u32 %s855, 4
        %s860 = smul.u32 %s859, 8
        %s861 = sadd.s32 %s860, %s858
        %s862 = scalar_lea.vmem [#allocation4], %s861
        %v863 = vld [vmem:[%s862] ss:$8 sm:$0xf]
        %v864 = vpack.c.bf16 %v852, %v852
        %v866 = vsel %vm414, %v864, 0
        %868 = vmatpush.bf16.msra.mxu0 0
        %869 = vmatpush.bf16.msra.mxu0 0
        %870 = vmatpush.bf16.msra.mxu0 0
        %871 = vmatpush.bf16.msra.mxu0 0
        %872 = vmatpush.bf16.msra.mxu0 0
        %873 = vmatpush.bf16.msra.mxu0 0
        %874 = vmatpush.bf16.msra.mxu0 %v402
        %875 = vmatpush.bf16.msra.mxu0 %v398
        %876 = vmatmul.bf16.gmra.mxu0 %v866
        %v877 = vpop.f32.mrf.mxu0
        %v878 = vadd.f32 0.0, %v877
        %v879 = vpop.f32.mrf.mxu0
        %880 = vdwg.mxu0
        %881 = vmatpush.bf16.msra.mxu0 0
        %882 = vmatpush.bf16.msra.mxu0 0
        %883 = vmatpush.bf16.msra.mxu0 0
        %884 = vmatpush.bf16.msra.mxu0 0
        %885 = vmatpush.bf16.msra.mxu0 0
        %886 = vmatpush.bf16.msra.mxu0 0
        %887 = vmatpush.bf16.msra.mxu0 %v403
        %888 = vmatpush.bf16.msra.mxu0 %v399
        %889 = vmatmul.bf16.gmra.mxu0 %v866
        %v890 = vpop.f32.mrf.mxu0
        %v891 = vadd.f32 0.0, %v890
        %v892 = vpop.f32.mrf.mxu0
        %893 = vdwg.mxu0
        %894 = vmatpush.bf16.msra.mxu0 0
        %895 = vmatpush.bf16.msra.mxu0 0
        %896 = vmatpush.bf16.msra.mxu0 0
        %897 = vmatpush.bf16.msra.mxu0 0
        %898 = vmatpush.bf16.msra.mxu0 0
        %899 = vmatpush.bf16.msra.mxu0 0
        %900 = vmatpush.bf16.msra.mxu0 %v404
        %901 = vmatpush.bf16.msra.mxu0 %v400
        %902 = vmatmul.bf16.gmra.mxu0 %v866
        %v903 = vpop.f32.mrf.mxu0
        %v904 = vadd.f32 0.0, %v903
        %v905 = vpop.f32.mrf.mxu0
        %906 = vdwg.mxu0
        %907 = vmatpush.bf16.msra.mxu0 0
        %908 = vmatpush.bf16.msra.mxu0 0
        %909 = vmatpush.bf16.msra.mxu0 0
        %910 = vmatpush.bf16.msra.mxu0 0
        %911 = vmatpush.bf16.msra.mxu0 0
        %912 = vmatpush.bf16.msra.mxu0 0
        %913 = vmatpush.bf16.msra.mxu0 %v405
        %914 = vmatpush.bf16.msra.mxu0 %v401
        %915 = vmatmul.bf16.gmra.mxu0 %v866
        %v916 = vpop.f32.mrf.mxu0
        %v917 = vadd.f32 0.0, %v916
        %v918 = vpop.f32.mrf.mxu0
        %919 = vdwg.mxu0
        %v924 = vrot.slane %v891, 7
        %v925 = vrot.slane %v904, 6
        %v926 = vrot.slane %v917, 5
        %v927 = vsel %vm477, %v878, %v924
        %v928 = vsel %vm479, %v925, %v926
        %v929 = vsel %vm481, %v927, %v928
        %v931 = vadd.f32 %v863, %v929
        %v932 = vxor.u32 %v931, 2147483648
        %v933 = vmul.f32 %v932, 1.442695
        %v934 = vpow.pop %v933
        %v935 = vadd.f32 %v934, 1.0
        %v936 = vrcp.pop %v935
        %v937 = vmul.f32 %v935, %v936
        %v938 = vsub.f32 1.0, %v937
        %v939 = vmul.f32 %v936, %v938
        %v940 = vadd.f32 %v936, %v939
        %vm941 = vweird.f32 %v935
        %vm942 = vweird.f32 %v936
        %vm943 = vmor %vm941, %vm942
        %v944 = vsel %vm943, %v936, %v940
        %v945 = vand.u32 2147483647, %v935
        %vm946 = vcmp.eq.f32.partialorder %v945, 8.507059e+37
        %v947 = vand.u32 %v935, 2147483648
        %v948 = vor.u32 1.1754944e-38, %v947
        %v949 = vsel %vm946, %v948, %v944
        %v950 = vmul.f32 1.0, %v949
        %v952 = vrot.slane %v931, 1
        %v954 = vxor.u32 %v952, 2147483648
        %v955 = vmul.f32 %v954, 1.442695
        %v956 = vpow.pop %v955
        %v957 = vadd.f32 %v956, 1.0
        %v958 = vrcp.pop %v957
        %v959 = vmul.f32 %v957, %v958
        %v960 = vsub.f32 1.0, %v959
        %v961 = vmul.f32 %v958, %v960
        %v962 = vadd.f32 %v958, %v961
        %vm963 = vweird.f32 %v957
        %vm964 = vweird.f32 %v958
        %vm965 = vmor %vm963, %vm964
        %v966 = vsel %vm965, %v958, %v962
        %v967 = vand.u32 2147483647, %v957
        %vm968 = vcmp.eq.f32.partialorder %v967, 8.507059e+37
        %v969 = vand.u32 %v957, 2147483648
        %v970 = vor.u32 1.1754944e-38, %v969
        %v971 = vsel %vm968, %v970, %v966
        %v972 = vmul.f32 1.0, %v971
        %v973 = vrot.slane %v931, 2
        %v975 = vtanh.pop %v973
        %v976 = vrot.slane %v931, 3
        %v978 = vxor.u32 %v976, 2147483648
        %v979 = vmul.f32 %v978, 1.442695
        %v980 = vpow.pop %v979
        %v981 = vadd.f32 %v980, 1.0
        %v982 = vrcp.pop %v981
        %v983 = vmul.f32 %v981, %v982
        %v984 = vsub.f32 1.0, %v983
        %v985 = vmul.f32 %v982, %v984
        %v986 = vadd.f32 %v982, %v985
        %vm987 = vweird.f32 %v981
        %vm988 = vweird.f32 %v982
        %vm989 = vmor %vm987, %vm988
        %v990 = vsel %vm989, %v982, %v986
        %v991 = vand.u32 2147483647, %v981
        %vm992 = vcmp.eq.f32.partialorder %v991, 8.507059e+37
        %v993 = vand.u32 %v981, 2147483648
        %v994 = vor.u32 1.1754944e-38, %v993
        %v995 = vsel %vm992, %v994, %v990
        %v996 = vmul.f32 1.0, %v995
        %v997 = vmul.f32 %v972, %v850
        %v998 = vmul.f32 %v950, %v975
        %v999 = vadd.f32 %v997, %v998
        %v1000 = vtanh.pop %v999
        %v1001 = vmul.f32 %v996, %v1000
        %s1002 = sadd.s32 %s281, 5
        %s1003 = sld [smem:[#allocation3 + %s1002]]
        %s1004 = sshra.s32 %s1003, 3
        %s1005 = sand.u32 %s1003, 7
        %s1006 = sshra.s32 %s1003, 3
        %s1007 = sand.u32 %s1003, 7
        %s1008 = smul.u32 %s1004, 4
        %s1009 = smul.u32 %s1008, 8
        %s1010 = sadd.s32 %s1009, %s1007
        %s1011 = scalar_lea.vmem [#allocation4], %s1010
        %v1012 = vld [vmem:[%s1011] ss:$8 sm:$0xf]
        %v1013 = vpack.c.bf16 %v1001, %v1001
        %v1015 = vsel %vm414, %v1013, 0
        %1017 = vmatpush.bf16.msra.mxu0 0
        %1018 = vmatpush.bf16.msra.mxu0 0
        %1019 = vmatpush.bf16.msra.mxu0 0
        %1020 = vmatpush.bf16.msra.mxu0 0
        %1021 = vmatpush.bf16.msra.mxu0 0
        %1022 = vmatpush.bf16.msra.mxu0 0
        %1023 = vmatpush.bf16.msra.mxu0 %v402
        %1024 = vmatpush.bf16.msra.mxu0 %v398
        %1025 = vmatmul.bf16.gmra.mxu0 %v1015
        %v1026 = vpop.f32.mrf.mxu0
        %v1027 = vadd.f32 0.0, %v1026
        %v1028 = vpop.f32.mrf.mxu0
        %1029 = vdwg.mxu0
        %1030 = vmatpush.bf16.msra.mxu0 0
        %1031 = vmatpush.bf16.msra.mxu0 0
        %1032 = vmatpush.bf16.msra.mxu0 0
        %1033 = vmatpush.bf16.msra.mxu0 0
        %1034 = vmatpush.bf16.msra.mxu0 0
        %1035 = vmatpush.bf16.msra.mxu0 0
        %1036 = vmatpush.bf16.msra.mxu0 %v403
        %1037 = vmatpush.bf16.msra.mxu0 %v399
        %1038 = vmatmul.bf16.gmra.mxu0 %v1015
        %v1039 = vpop.f32.mrf.mxu0
        %v1040 = vadd.f32 0.0, %v1039
        %v1041 = vpop.f32.mrf.mxu0
        %1042 = vdwg.mxu0
        %1043 = vmatpush.bf16.msra.mxu0 0
        %1044 = vmatpush.bf16.msra.mxu0 0
        %1045 = vmatpush.bf16.msra.mxu0 0
        %1046 = vmatpush.bf16.msra.mxu0 0
        %1047 = vmatpush.bf16.msra.mxu0 0
        %1048 = vmatpush.bf16.msra.mxu0 0
        %1049 = vmatpush.bf16.msra.mxu0 %v404
        %1050 = vmatpush.bf16.msra.mxu0 %v400
        %1051 = vmatmul.bf16.gmra.mxu0 %v1015
        %v1052 = vpop.f32.mrf.mxu0
        %v1053 = vadd.f32 0.0, %v1052
        %v1054 = vpop.f32.mrf.mxu0
        %1055 = vdwg.mxu0
        %1056 = vmatpush.bf16.msra.mxu0 0
        %1057 = vmatpush.bf16.msra.mxu0 0
        %1058 = vmatpush.bf16.msra.mxu0 0
        %1059 = vmatpush.bf16.msra.mxu0 0
        %1060 = vmatpush.bf16.msra.mxu0 0
        %1061 = vmatpush.bf16.msra.mxu0 0
        %1062 = vmatpush.bf16.msra.mxu0 %v405
        %1063 = vmatpush.bf16.msra.mxu0 %v401
        %1064 = vmatmul.bf16.gmra.mxu0 %v1015
        %v1065 = vpop.f32.mrf.mxu0
        %v1066 = vadd.f32 0.0, %v1065
        %v1067 = vpop.f32.mrf.mxu0
        %1068 = vdwg.mxu0
        %v1073 = vrot.slane %v1040, 7
        %v1074 = vrot.slane %v1053, 6
        %v1075 = vrot.slane %v1066, 5
        %v1076 = vsel %vm477, %v1027, %v1073
        %v1077 = vsel %vm479, %v1074, %v1075
        %v1078 = vsel %vm481, %v1076, %v1077
        %v1080 = vadd.f32 %v1012, %v1078
        %v1081 = vxor.u32 %v1080, 2147483648
        %v1082 = vmul.f32 %v1081, 1.442695
        %v1083 = vpow.pop %v1082
        %v1084 = vadd.f32 %v1083, 1.0
        %v1085 = vrcp.pop %v1084
        %v1086 = vmul.f32 %v1084, %v1085
        %v1087 = vsub.f32 1.0, %v1086
        %v1088 = vmul.f32 %v1085, %v1087
        %v1089 = vadd.f32 %v1085, %v1088
        %vm1090 = vweird.f32 %v1084
        %vm1091 = vweird.f32 %v1085
        %vm1092 = vmor %vm1090, %vm1091
        %v1093 = vsel %vm1092, %v1085, %v1089
        %v1094 = vand.u32 2147483647, %v1084
        %vm1095 = vcmp.eq.f32.partialorder %v1094, 8.507059e+37
        %v1096 = vand.u32 %v1084, 2147483648
        %v1097 = vor.u32 1.1754944e-38, %v1096
        %v1098 = vsel %vm1095, %v1097, %v1093
        %v1099 = vmul.f32 1.0, %v1098
        %v1101 = vrot.slane %v1080, 1
        %v1103 = vxor.u32 %v1101, 2147483648
        %v1104 = vmul.f32 %v1103, 1.442695
        %v1105 = vpow.pop %v1104
        %v1106 = vadd.f32 %v1105, 1.0
        %v1107 = vrcp.pop %v1106
        %v1108 = vmul.f32 %v1106, %v1107
        %v1109 = vsub.f32 1.0, %v1108
        %v1110 = vmul.f32 %v1107, %v1109
        %v1111 = vadd.f32 %v1107, %v1110
        %vm1112 = vweird.f32 %v1106
        %vm1113 = vweird.f32 %v1107
        %vm1114 = vmor %vm1112, %vm1113
        %v1115 = vsel %vm1114, %v1107, %v1111
        %v1116 = vand.u32 2147483647, %v1106
        %vm1117 = vcmp.eq.f32.partialorder %v1116, 8.507059e+37
        %v1118 = vand.u32 %v1106, 2147483648
        %v1119 = vor.u32 1.1754944e-38, %v1118
        %v1120 = vsel %vm1117, %v1119, %v1115
        %v1121 = vmul.f32 1.0, %v1120
        %v1122 = vrot.slane %v1080, 2
        %v1124 = vtanh.pop %v1122
        %v1125 = vrot.slane %v1080, 3
        %v1127 = vxor.u32 %v1125, 2147483648
        %v1128 = vmul.f32 %v1127, 1.442695
        %v1129 = vpow.pop %v1128
        %v1130 = vadd.f32 %v1129, 1.0
        %v1131 = vrcp.pop %v1130
        %v1132 = vmul.f32 %v1130, %v1131
        %v1133 = vsub.f32 1.0, %v1132
        %v1134 = vmul.f32 %v1131, %v1133
        %v1135 = vadd.f32 %v1131, %v1134
        %vm1136 = vweird.f32 %v1130
        %vm1137 = vweird.f32 %v1131
        %vm1138 = vmor %vm1136, %vm1137
        %v1139 = vsel %vm1138, %v1131, %v1135
        %v1140 = vand.u32 2147483647, %v1130
        %vm1141 = vcmp.eq.f32.partialorder %v1140, 8.507059e+37
        %v1142 = vand.u32 %v1130, 2147483648
        %v1143 = vor.u32 1.1754944e-38, %v1142
        %v1144 = vsel %vm1141, %v1143, %v1139
        %v1145 = vmul.f32 1.0, %v1144
        %v1146 = vmul.f32 %v1121, %v999
        %v1147 = vmul.f32 %v1099, %v1124
        %v1148 = vadd.f32 %v1146, %v1147
        %v1149 = vtanh.pop %v1148
        %v1150 = vmul.f32 %v1145, %v1149
        %s1151 = sadd.s32 %s281, 6
        %s1152 = sld [smem:[#allocation3 + %s1151]]
        %s1153 = sshra.s32 %s1152, 3
        %s1154 = sand.u32 %s1152, 7
        %s1155 = sshra.s32 %s1152, 3
        %s1156 = sand.u32 %s1152, 7
        %s1157 = smul.u32 %s1153, 4
        %s1158 = smul.u32 %s1157, 8
        %s1159 = sadd.s32 %s1158, %s1156
        %s1160 = scalar_lea.vmem [#allocation4], %s1159
        %v1161 = vld [vmem:[%s1160] ss:$8 sm:$0xf]
        %v1162 = vpack.c.bf16 %v1150, %v1150
        %v1164 = vsel %vm414, %v1162, 0
        %1166 = vmatpush.bf16.msra.mxu0 0
        %1167 = vmatpush.bf16.msra.mxu0 0
        %1168 = vmatpush.bf16.msra.mxu0 0
        %1169 = vmatpush.bf16.msra.mxu0 0
        %1170 = vmatpush.bf16.msra.mxu0 0
        %1171 = vmatpush.bf16.msra.mxu0 0
        %1172 = vmatpush.bf16.msra.mxu0 %v402
        %1173 = vmatpush.bf16.msra.mxu0 %v398
        %1174 = vmatmul.bf16.gmra.mxu0 %v1164
        %v1175 = vpop.f32.mrf.mxu0
        %v1176 = vadd.f32 0.0, %v1175
        %v1177 = vpop.f32.mrf.mxu0
        %1178 = vdwg.mxu0
        %1179 = vmatpush.bf16.msra.mxu0 0
        %1180 = vmatpush.bf16.msra.mxu0 0
        %1181 = vmatpush.bf16.msra.mxu0 0
        %1182 = vmatpush.bf16.msra.mxu0 0
        %1183 = vmatpush.bf16.msra.mxu0 0
        %1184 = vmatpush.bf16.msra.mxu0 0
        %1185 = vmatpush.bf16.msra.mxu0 %v403
        %1186 = vmatpush.bf16.msra.mxu0 %v399
        %1187 = vmatmul.bf16.gmra.mxu0 %v1164
        %v1188 = vpop.f32.mrf.mxu0
        %v1189 = vadd.f32 0.0, %v1188
        %v1190 = vpop.f32.mrf.mxu0
        %1191 = vdwg.mxu0
        %1192 = vmatpush.bf16.msra.mxu0 0
        %1193 = vmatpush.bf16.msra.mxu0 0
        %1194 = vmatpush.bf16.msra.mxu0 0
        %1195 = vmatpush.bf16.msra.mxu0 0
        %1196 = vmatpush.bf16.msra.mxu0 0
        %1197 = vmatpush.bf16.msra.mxu0 0
        %1198 = vmatpush.bf16.msra.mxu0 %v404
        %1199 = vmatpush.bf16.msra.mxu0 %v400
        %1200 = vmatmul.bf16.gmra.mxu0 %v1164
        %v1201 = vpop.f32.mrf.mxu0
        %v1202 = vadd.f32 0.0, %v1201
        %v1203 = vpop.f32.mrf.mxu0
        %1204 = vdwg.mxu0
        %1205 = vmatpush.bf16.msra.mxu0 0
        %1206 = vmatpush.bf16.msra.mxu0 0
        %1207 = vmatpush.bf16.msra.mxu0 0
        %1208 = vmatpush.bf16.msra.mxu0 0
        %1209 = vmatpush.bf16.msra.mxu0 0
        %1210 = vmatpush.bf16.msra.mxu0 0
        %1211 = vmatpush.bf16.msra.mxu0 %v405
        %1212 = vmatpush.bf16.msra.mxu0 %v401
        %1213 = vmatmul.bf16.gmra.mxu0 %v1164
        %v1214 = vpop.f32.mrf.mxu0
        %v1215 = vadd.f32 0.0, %v1214
        %v1216 = vpop.f32.mrf.mxu0
        %1217 = vdwg.mxu0
        %v1222 = vrot.slane %v1189, 7
        %v1223 = vrot.slane %v1202, 6
        %v1224 = vrot.slane %v1215, 5
        %v1225 = vsel %vm477, %v1176, %v1222
        %v1226 = vsel %vm479, %v1223, %v1224
        %v1227 = vsel %vm481, %v1225, %v1226
        %v1229 = vadd.f32 %v1161, %v1227
        %v1230 = vxor.u32 %v1229, 2147483648
        %v1231 = vmul.f32 %v1230, 1.442695
        %v1232 = vpow.pop %v1231
        %v1233 = vadd.f32 %v1232, 1.0
        %v1234 = vrcp.pop %v1233
        %v1235 = vmul.f32 %v1233, %v1234
        %v1236 = vsub.f32 1.0, %v1235
        %v1237 = vmul.f32 %v1234, %v1236
        %v1238 = vadd.f32 %v1234, %v1237
        %vm1239 = vweird.f32 %v1233
        %vm1240 = vweird.f32 %v1234
        %vm1241 = vmor %vm1239, %vm1240
        %v1242 = vsel %vm1241, %v1234, %v1238
        %v1243 = vand.u32 2147483647, %v1233
        %vm1244 = vcmp.eq.f32.partialorder %v1243, 8.507059e+37
        %v1245 = vand.u32 %v1233, 2147483648
        %v1246 = vor.u32 1.1754944e-38, %v1245
        %v1247 = vsel %vm1244, %v1246, %v1242
        %v1248 = vmul.f32 1.0, %v1247
        %v1250 = vrot.slane %v1229, 1
        %v1252 = vxor.u32 %v1250, 2147483648
        %v1253 = vmul.f32 %v1252, 1.442695
        %v1254 = vpow.pop %v1253
        %v1255 = vadd.f32 %v1254, 1.0
        %v1256 = vrcp.pop %v1255
        %v1257 = vmul.f32 %v1255, %v1256
        %v1258 = vsub.f32 1.0, %v1257
        %v1259 = vmul.f32 %v1256, %v1258
        %v1260 = vadd.f32 %v1256, %v1259
        %vm1261 = vweird.f32 %v1255
        %vm1262 = vweird.f32 %v1256
        %vm1263 = vmor %vm1261, %vm1262
        %v1264 = vsel %vm1263, %v1256, %v1260
        %v1265 = vand.u32 2147483647, %v1255
        %vm1266 = vcmp.eq.f32.partialorder %v1265, 8.507059e+37
        %v1267 = vand.u32 %v1255, 2147483648
        %v1268 = vor.u32 1.1754944e-38, %v1267
        %v1269 = vsel %vm1266, %v1268, %v1264
        %v1270 = vmul.f32 1.0, %v1269
        %v1271 = vrot.slane %v1229, 2
        %v1273 = vtanh.pop %v1271
        %v1274 = vrot.slane %v1229, 3
        %v1276 = vxor.u32 %v1274, 2147483648
        %v1277 = vmul.f32 %v1276, 1.442695
        %v1278 = vpow.pop %v1277
        %v1279 = vadd.f32 %v1278, 1.0
        %v1280 = vrcp.pop %v1279
        %v1281 = vmul.f32 %v1279, %v1280
        %v1282 = vsub.f32 1.0, %v1281
        %v1283 = vmul.f32 %v1280, %v1282
        %v1284 = vadd.f32 %v1280, %v1283
        %vm1285 = vweird.f32 %v1279
        %vm1286 = vweird.f32 %v1280
        %vm1287 = vmor %vm1285, %vm1286
        %v1288 = vsel %vm1287, %v1280, %v1284
        %v1289 = vand.u32 2147483647, %v1279
        %vm1290 = vcmp.eq.f32.partialorder %v1289, 8.507059e+37
        %v1291 = vand.u32 %v1279, 2147483648
        %v1292 = vor.u32 1.1754944e-38, %v1291
        %v1293 = vsel %vm1290, %v1292, %v1288
        %v1294 = vmul.f32 1.0, %v1293
        %v1295 = vmul.f32 %v1270, %v1148
        %v1296 = vmul.f32 %v1248, %v1273
        %v1297 = vadd.f32 %v1295, %v1296
        %v1298 = vtanh.pop %v1297
        %v1299 = vmul.f32 %v1294, %v1298
        %s1300 = sadd.s32 %s281, 7
        %s1301 = sld [smem:[#allocation3 + %s1300]]
        %s1302 = sshra.s32 %s1301, 3
        %s1303 = sand.u32 %s1301, 7
        %s1304 = sshra.s32 %s1301, 3
        %s1305 = sand.u32 %s1301, 7
        %s1306 = smul.u32 %s1302, 4
        %s1307 = smul.u32 %s1306, 8
        %s1308 = sadd.s32 %s1307, %s1305
        %s1309 = scalar_lea.vmem [#allocation4], %s1308
        %v1310 = vld [vmem:[%s1309] ss:$8 sm:$0xf]
        %v1311 = vpack.c.bf16 %v1299, %v1299
        %v1313 = vsel %vm414, %v1311, 0
        %1315 = vmatpush.bf16.msra.mxu0 0
        %1316 = vmatpush.bf16.msra.mxu0 0
        %1317 = vmatpush.bf16.msra.mxu0 0
        %1318 = vmatpush.bf16.msra.mxu0 0
        %1319 = vmatpush.bf16.msra.mxu0 0
        %1320 = vmatpush.bf16.msra.mxu0 0
        %1321 = vmatpush.bf16.msra.mxu0 %v402
        %1322 = vmatpush.bf16.msra.mxu0 %v398
        %1323 = vmatmul.bf16.gmra.mxu0 %v1313
        %v1324 = vpop.f32.mrf.mxu0
        %v1325 = vadd.f32 0.0, %v1324
        %v1326 = vpop.f32.mrf.mxu0
        %1327 = vdwg.mxu0
        %1328 = vmatpush.bf16.msra.mxu0 0
        %1329 = vmatpush.bf16.msra.mxu0 0
        %1330 = vmatpush.bf16.msra.mxu0 0
        %1331 = vmatpush.bf16.msra.mxu0 0
        %1332 = vmatpush.bf16.msra.mxu0 0
        %1333 = vmatpush.bf16.msra.mxu0 0
        %1334 = vmatpush.bf16.msra.mxu0 %v403
        %1335 = vmatpush.bf16.msra.mxu0 %v399
        %1336 = vmatmul.bf16.gmra.mxu0 %v1313
        %v1337 = vpop.f32.mrf.mxu0
        %v1338 = vadd.f32 0.0, %v1337
        %v1339 = vpop.f32.mrf.mxu0
        %1340 = vdwg.mxu0
        %1341 = vmatpush.bf16.msra.mxu0 0
        %1342 = vmatpush.bf16.msra.mxu0 0
        %1343 = vmatpush.bf16.msra.mxu0 0
        %1344 = vmatpush.bf16.msra.mxu0 0
        %1345 = vmatpush.bf16.msra.mxu0 0
        %1346 = vmatpush.bf16.msra.mxu0 0
        %1347 = vmatpush.bf16.msra.mxu0 %v404
        %1348 = vmatpush.bf16.msra.mxu0 %v400
        %1349 = vmatmul.bf16.gmra.mxu0 %v1313
        %v1350 = vpop.f32.mrf.mxu0
        %v1351 = vadd.f32 0.0, %v1350
        %v1352 = vpop.f32.mrf.mxu0
        %1353 = vdwg.mxu0
        %1354 = vmatpush.bf16.msra.mxu0 0
        %1355 = vmatpush.bf16.msra.mxu0 0
        %1356 = vmatpush.bf16.msra.mxu0 0
        %1357 = vmatpush.bf16.msra.mxu0 0
        %1358 = vmatpush.bf16.msra.mxu0 0
        %1359 = vmatpush.bf16.msra.mxu0 0
        %1360 = vmatpush.bf16.msra.mxu0 %v405
        %1361 = vmatpush.bf16.msra.mxu0 %v401
        %1362 = vmatmul.bf16.gmra.mxu0 %v1313
        %v1363 = vpop.f32.mrf.mxu0
        %v1364 = vadd.f32 0.0, %v1363
        %v1365 = vpop.f32.mrf.mxu0
        %1366 = vdwg.mxu0
        %v1371 = vrot.slane %v1338, 7
        %v1372 = vrot.slane %v1351, 6
        %v1373 = vrot.slane %v1364, 5
        %v1374 = vsel %vm477, %v1325, %v1371
        %v1375 = vsel %vm479, %v1372, %v1373
        %v1376 = vsel %vm481, %v1374, %v1375
        %v1378 = vadd.f32 %v1310, %v1376
        %v1379 = vxor.u32 %v1378, 2147483648
        %v1380 = vmul.f32 %v1379, 1.442695
        %v1381 = vpow.pop %v1380
        %v1382 = vadd.f32 %v1381, 1.0
        %v1383 = vrcp.pop %v1382
        %v1384 = vmul.f32 %v1382, %v1383
        %v1385 = vsub.f32 1.0, %v1384
        %v1386 = vmul.f32 %v1383, %v1385
        %v1387 = vadd.f32 %v1383, %v1386
        %vm1388 = vweird.f32 %v1382
        %vm1389 = vweird.f32 %v1383
        %vm1390 = vmor %vm1388, %vm1389
        %v1391 = vsel %vm1390, %v1383, %v1387
        %v1392 = vand.u32 2147483647, %v1382
        %vm1393 = vcmp.eq.f32.partialorder %v1392, 8.507059e+37
        %v1394 = vand.u32 %v1382, 2147483648
        %v1395 = vor.u32 1.1754944e-38, %v1394
        %v1396 = vsel %vm1393, %v1395, %v1391
        %v1397 = vmul.f32 1.0, %v1396
        %v1399 = vrot.slane %v1378, 1
        %v1401 = vxor.u32 %v1399, 2147483648
        %v1402 = vmul.f32 %v1401, 1.442695
        %v1403 = vpow.pop %v1402
        %v1404 = vadd.f32 %v1403, 1.0
        %v1405 = vrcp.pop %v1404
        %v1406 = vmul.f32 %v1404, %v1405
        %v1407 = vsub.f32 1.0, %v1406
        %v1408 = vmul.f32 %v1405, %v1407
        %v1409 = vadd.f32 %v1405, %v1408
        %vm1410 = vweird.f32 %v1404
        %vm1411 = vweird.f32 %v1405
        %vm1412 = vmor %vm1410, %vm1411
        %v1413 = vsel %vm1412, %v1405, %v1409
        %v1414 = vand.u32 2147483647, %v1404
        %vm1415 = vcmp.eq.f32.partialorder %v1414, 8.507059e+37
        %v1416 = vand.u32 %v1404, 2147483648
        %v1417 = vor.u32 1.1754944e-38, %v1416
        %v1418 = vsel %vm1415, %v1417, %v1413
        %v1419 = vmul.f32 1.0, %v1418
        %v1420 = vrot.slane %v1378, 2
        %v1422 = vtanh.pop %v1420
        %v1423 = vrot.slane %v1378, 3
        %v1425 = vxor.u32 %v1423, 2147483648
        %v1426 = vmul.f32 %v1425, 1.442695
        %v1427 = vpow.pop %v1426
        %v1428 = vadd.f32 %v1427, 1.0
        %v1429 = vrcp.pop %v1428
        %v1430 = vmul.f32 %v1428, %v1429
        %v1431 = vsub.f32 1.0, %v1430
        %v1432 = vmul.f32 %v1429, %v1431
        %v1433 = vadd.f32 %v1429, %v1432
        %vm1434 = vweird.f32 %v1428
        %vm1435 = vweird.f32 %v1429
        %vm1436 = vmor %vm1434, %vm1435
        %v1437 = vsel %vm1436, %v1429, %v1433
        %v1438 = vand.u32 2147483647, %v1428
        %vm1439 = vcmp.eq.f32.partialorder %v1438, 8.507059e+37
        %v1440 = vand.u32 %v1428, 2147483648
        %v1441 = vor.u32 1.1754944e-38, %v1440
        %v1442 = vsel %vm1439, %v1441, %v1437
        %v1443 = vmul.f32 1.0, %v1442
        %v1444 = vmul.f32 %v1419, %v1297
        %v1445 = vmul.f32 %v1397, %v1422
        %v1446 = vadd.f32 %v1444, %v1445
        %v1447 = vtanh.pop %v1446
        %v1448 = vmul.f32 %v1443, %v1447
        %s1449 = scalar_lea.vmem [#allocation7], %s1308
        %v1450 = vld [vmem:[%s1449] ss:$8 sm:$0xf]
        %v1451 = vxor.u32 %v1450, 2147483648
        %v1452 = vmul.f32 %v1451, 1.442695
        %v1453 = vpow.pop %v1452
        %v1454 = vadd.f32 %v1453, 1.0
        %v1455 = vrcp.pop %v1454
        %v1456 = vmul.f32 %v1454, %v1455
        %v1457 = vsub.f32 1.0, %v1456
        %v1458 = vmul.f32 %v1455, %v1457
        %v1459 = vadd.f32 %v1455, %v1458
        %vm1460 = vweird.f32 %v1454
        %vm1461 = vweird.f32 %v1455
        %vm1462 = vmor %vm1460, %vm1461
        %v1463 = vsel %vm1462, %v1455, %v1459
        %v1464 = vand.u32 2147483647, %v1454
        %vm1465 = vcmp.eq.f32.partialorder %v1464, 8.507059e+37
        %v1466 = vand.u32 %v1454, 2147483648
        %v1467 = vor.u32 1.1754944e-38, %v1466
        %v1468 = vsel %vm1465, %v1467, %v1463
        %v1469 = vmul.f32 1.0, %v1468
        %v1471 = vrot.slane %v1450, 1
        %v1473 = vxor.u32 %v1471, 2147483648
        %v1474 = vmul.f32 %v1473, 1.442695
        %v1475 = vpow.pop %v1474
        %v1476 = vadd.f32 %v1475, 1.0
        %v1477 = vrcp.pop %v1476
        %v1478 = vmul.f32 %v1476, %v1477
        %v1479 = vsub.f32 1.0, %v1478
        %v1480 = vmul.f32 %v1477, %v1479
        %v1481 = vadd.f32 %v1477, %v1480
        %vm1482 = vweird.f32 %v1476
        %vm1483 = vweird.f32 %v1477
        %vm1484 = vmor %vm1482, %vm1483
        %v1485 = vsel %vm1484, %v1477, %v1481
        %v1486 = vand.u32 2147483647, %v1476
        %vm1487 = vcmp.eq.f32.partialorder %v1486, 8.507059e+37
        %v1488 = vand.u32 %v1476, 2147483648
        %v1489 = vor.u32 1.1754944e-38, %v1488
        %v1490 = vsel %vm1487, %v1489, %v1485
        %v1491 = vmul.f32 1.0, %v1490
        %v1492 = vrot.slane %v1450, 2
        %v1494 = vtanh.pop %v1492
        %v1495 = vrot.slane %v1450, 3
        %v1497 = vxor.u32 %v1495, 2147483648
        %v1498 = vmul.f32 %v1497, 1.442695
        %v1499 = vpow.pop %v1498
        %v1500 = vadd.f32 %v1499, 1.0
        %v1501 = vrcp.pop %v1500
        %v1502 = vmul.f32 %v1500, %v1501
        %v1503 = vsub.f32 1.0, %v1502
        %v1504 = vmul.f32 %v1501, %v1503
        %v1505 = vadd.f32 %v1501, %v1504
        %vm1506 = vweird.f32 %v1500
        %vm1507 = vweird.f32 %v1501
        %vm1508 = vmor %vm1506, %vm1507
        %v1509 = vsel %vm1508, %v1501, %v1505
        %v1510 = vand.u32 2147483647, %v1500
        %vm1511 = vcmp.eq.f32.partialorder %v1510, 8.507059e+37
        %v1512 = vand.u32 %v1500, 2147483648
        %v1513 = vor.u32 1.1754944e-38, %v1512
        %v1514 = vsel %vm1511, %v1513, %v1509
        %v1515 = vmul.f32 1.0, %v1514
        %v1516 = vmul.f32 %v1491, 0.0
        %v1517 = vmul.f32 %v1469, %v1494
        %v1518 = vadd.f32 %v1516, %v1517
        %v1519 = vtanh.pop %v1518
        %v1520 = vmul.f32 %v1515, %v1519
        %v1521 = vld [vmem:[%s4] sm:$0xff]
        %v1522 = vld [vmem:[%s4 + $0x8] sm:$0xff]
        %v1523 = vld [vmem:[%s4 + $0x10] sm:$0xff]
        %v1524 = vld [vmem:[%s4 + $0x18] sm:$0xff]
        %v1525 = vld [vmem:[%s5] sm:$0xff]
        %v1526 = vld [vmem:[%s5 + $0x8] sm:$0xff]
        %v1527 = vld [vmem:[%s5 + $0x10] sm:$0xff]
        %v1528 = vld [vmem:[%s5 + $0x18] sm:$0xff]
        %v1530 = vsel %vm414, %v1520, 0
        %1532 = vmatpush.msra.mxu0 0.0
        %1533 = vmatpush.msra.mxu0 0.0
        %1534 = vmatpush.msra.mxu0 0.0
        %1535 = vmatpush.msra.mxu0 0.0
        %1536 = vmatpush.msra.mxu0 0.0
        %1537 = vmatpush.msra.mxu0 0.0
        %1538 = vmatpush.msra.mxu0 0.0
        %1539 = vmatpush.msra.mxu0 0.0
        %1540 = vmatpush.msra.mxu0 0.0
        %1541 = vmatpush.msra.mxu0 0.0
        %1542 = vmatpush.msra.mxu0 0.0
        %1543 = vmatpush.msra.mxu0 0.0
        %1544 = vmatpush.msra.mxu0 %v1528
        %1545 = vmatpush.msra.mxu0 %v1527
        %1546 = vmatpush.msra.mxu0 %v1526
        %1547 = vmatpush.msra.mxu0 %v1525
        %1548 = vmatmul.f32.gmra.mxu0 %v1530
        %v1549 = vpop.f32.mrf.mxu0
        %v1550 = vadd.f32 0.0, %v1549
        %1551 = vdwg.mxu0
        %v1553 = vsel %vm414, %v1448, 0
        %1555 = vmatpush.msra.mxu0 0.0
        %1556 = vmatpush.msra.mxu0 0.0
        %1557 = vmatpush.msra.mxu0 0.0
        %1558 = vmatpush.msra.mxu0 0.0
        %1559 = vmatpush.msra.mxu0 0.0
        %1560 = vmatpush.msra.mxu0 0.0
        %1561 = vmatpush.msra.mxu0 0.0
        %1562 = vmatpush.msra.mxu0 0.0
        %1563 = vmatpush.msra.mxu0 0.0
        %1564 = vmatpush.msra.mxu0 0.0
        %1565 = vmatpush.msra.mxu0 0.0
        %1566 = vmatpush.msra.mxu0 0.0
        %1567 = vmatpush.msra.mxu0 %v1524
        %1568 = vmatpush.msra.mxu0 %v1523
        %1569 = vmatpush.msra.mxu0 %v1522
        %1570 = vmatpush.msra.mxu0 %v1521
        %1571 = vmatmul.f32.gmra.mxu0 %v1553
        %v1572 = vpop.f32.mrf.mxu0
        %v1573 = vadd.f32 %v1550, %v1572
        %1574 = vdwg.mxu0
        %v1575 = vld [vmem:[%s6] sm:$0x1]
        %v1576 = vadd.f32 %v1573, %v1575
        %vm1577 = vcmask 32768
        %v1578 = vsel %vm1577, %v1576, -inf
        %1579 = vmax.xlane.f32.xlu0 %v1578
        %v1580 = vpop.xlane.xlu0 %1579
        %v1581 = vsub.f32 %v1576, %v1580
        %v1582 = vmul.f32 %v1581, 1.442695
        %v1583 = vpow.pop %v1582
        %v1584 = vsel %vm1577, %v1583, 0.0
        %1585 = vadd.xlane.f32.xlu0 %v1584
        %v1586 = vpop.xlane.xlu0 %1585
        %v1587 = vlog2.pop %v1586
        %v1588 = vmul.f32 %v1587, 0.6931472
        %v1589 = vsub.f32 %v1581, %v1588
        %1590 = vst.msk [vmem:[%s271] sm:$0x1] %vm1577, %v1589
        %s1591 = sand.u32 %s165, 1
        %s1592 = scalar_lea.sflag [#allocation6], %s1591
        %s1593 = sand.u32 %s165, 1
        %s1594 = scalar_lea.vmem [#allocation9], %s1593
        // Predicated region
        $region53: #{tpu_custom_call.1} parent=43 // pred_check
          %p1595 = pneg %p175
        $region54: #{tpu_custom_call.1} parent=43 // pred_check_branch
          %1597 = sbr.rel (%p1595) target = $region56
        $region55: #{tpu_custom_call.1} parent=43 // pred_region
          %1599 = vsyncadd %s1592, 0
          %s1600 = scalar_lea.hbm %s7, %s31
          %s1602 = sshll.u32 %s1594, 4
          %s1603 = int_to_ptr.vmem [resolvable:$true] %s1602
          %s1604 = sshll.u32 %s1600, 4
          %s1605 = int_to_ptr.hbm [resolvable:$true] %s1604
          %1607 = dma.vmem_to_hbm [thread:$0]  %s1603, 16, %s1605, %s1592
        $region56: #{tpu_custom_call.1} parent=43 // pred_fallthru
          _
      $region44: #{tpu_custom_call.1} parent=5 // pred_fallthru
        _
      %p1608 = scmp.le.s32.totalorder 2, %s26
      // Predicated region
      $region57: #{tpu_custom_call.1} parent=5 // pred_check
        %p1609 = pneg %p1608
      $region58: #{tpu_custom_call.1} parent=5 // pred_check_branch
        %1611 = sbr.rel (%p1609) target = $region60
      $region59: #{tpu_custom_call.1} parent=5 // pred_region
        %s1612 = ssub.s32 %s26, 2
        // Predicated region
        $region61: #{tpu_custom_call.1} parent=59 // pred_check
          %p1613 = pneg %p181
        $region62: #{tpu_custom_call.1} parent=59 // pred_check_branch
          %1615 = sbr.rel (%p1613) target = $region64
        $region63: #{tpu_custom_call.1} parent=59 // pred_region
          %s1616 = sand.u32 %s166, 1
          %s1617 = scalar_lea.sflag [#allocation6], %s1616
          %s1618 = sand.u32 %s166, 1
          %s1619 = scalar_lea.vmem [#allocation9], %s1618
          %1621 = dma.done %s1617, 16
        $region64: #{tpu_custom_call.1} parent=59 // pred_fallthru
          _
      $region60: #{tpu_custom_call.1} parent=5 // pred_fallthru
        _
    $region6: #{tpu_custom_call.1} parent=1 // loop_footer
      %s30 = sadd.s32 1, %s26
    $region7: #{tpu_custom_call.1} parent=1 // loop_footer_branch
      %25 = sbr.rel target = $region3
    $region8: #{tpu_custom_call.1} parent=1 // loop_exit
      _
    %1622 = vsyncpa [#allocation5], 1
    %s1623 = scalar_lea.sflag [#allocation5], 1
    %1624 = vsyncpa %s1623, 1
    %1625 = vsyncpa [#allocation8], 1
    %1626 = vsyncpa [#allocation6], 1
    %s1627 = scalar_lea.sflag [#allocation6], 1
    %1628 = vsyncpa %s1627, 1

</llo_original>
